<compile_context>
chip_gen: v7x
topology: tpu7x:2x2x1
jax: 0.10.0
libtpu: 0.0.40
codegen_flags: <defaults>
</compile_context>

<pallas_src>
import functools
import math

import jax
import jax.numpy as jnp
import numpy as np
from jax import lax
from jax.experimental import pallas as pl
from jax.experimental.pallas import tpu as pltpu


_LN_EPS = 1e-12                      # HF BertLayerNorm eps
_GELU_C = math.sqrt(2.0 / math.pi)


def _gelu_tanh(x):
    return 0.5 * x * (1.0 + jnp.tanh(_GELU_C * (x + 0.044715 * x * x * x)))


def _layer_norm(x, gamma, beta):
    mu = jnp.mean(x, axis=-1, keepdims=True)
    xc = x - mu
    var = jnp.mean(xc * xc, axis=-1, keepdims=True)
    return xc * lax.rsqrt(var + _LN_EPS) * gamma + beta


def _bert_layer_kernel(x_ref, wqkv_ref, bqkv_ref, wo_ref, bo_ref,
                       ln1_g_ref, ln1_b_ref, wi_ref, bi_ref,
                       wo2_ref, bo2_ref, ln2_g_ref, ln2_b_ref,
                       out_ref, *, num_heads, head_dim):
    x = x_ref[...]                                   # [S, H] (batch squeezed)
    hidden = num_heads * head_dim

    # Fused Q/K/V projection (1/sqrt(head_dim) pre-folded into the Q slice).
    qkv = jnp.dot(x, wqkv_ref[...],
                  preferred_element_type=jnp.float32) + bqkv_ref[...]

    # Per-head scaled-dot-product attention (static head loop; tiny heads).
    ctx_heads = []
    for h in range(num_heads):
        lo = h * head_dim
        qh = qkv[:, lo:lo + head_dim]                            # [S, hd]
        kh = qkv[:, hidden + lo:hidden + lo + head_dim]          # [S, hd]
        vh = qkv[:, 2 * hidden + lo:2 * hidden + lo + head_dim]  # [S, hd]

        s = lax.dot_general(qh, kh, (((1,), (1,)), ((), ())),
                            preferred_element_type=jnp.float32)  # [S, S]
        m = jnp.max(s, axis=-1, keepdims=True)
        e = jnp.exp(s - m)
        p = e * pl.reciprocal(jnp.sum(e, axis=-1, keepdims=True), approx=True)
        ctx_heads.append(jnp.dot(p, vh, preferred_element_type=jnp.float32))
    ctx = jnp.concatenate(ctx_heads, axis=-1)        # [S, H]

    # Attention output dense + residual + LayerNorm.
    attn_out = jnp.dot(ctx, wo_ref[...],
                       preferred_element_type=jnp.float32) + bo_ref[...]
    h1 = _layer_norm(attn_out + x, ln1_g_ref[...], ln1_b_ref[...])

    # Feed-forward (GELU) + residual + LayerNorm.
    inter = _gelu_tanh(jnp.dot(h1, wi_ref[...],
                               preferred_element_type=jnp.float32) + bi_ref[...])
    ffn = jnp.dot(inter, wo2_ref[...],
                  preferred_element_type=jnp.float32) + bo2_ref[...]
    out_ref[0] = _layer_norm(ffn + h1, ln2_g_ref[...],
                             ln2_b_ref[...]).astype(out_ref.dtype)


def bert_layer(x, p, *, num_heads):
    """One fused BERT encoder layer.  x: [B, S, H] (f32)."""
    B, S, H = x.shape
    head_dim = H // num_heads
    inv_scale = 1.0 / math.sqrt(head_dim)

    # Trace-time weight prep (tiny): fused QKV, torch [out,in] -> [in,out].
    wqkv = jnp.concatenate(
        [p["wq"].T * inv_scale, p["wk"].T, p["wv"].T], axis=1)        # [H, 3H]
    bqkv = jnp.concatenate(
        [p["bq"] * inv_scale, p["bk"], p["bv"]]).reshape(1, 3 * H)
    wo = p["wo"].T
    bo = p["bo"].reshape(1, H)
    wi = p["wi"].T                                                    # [H, FF]
    bi = p["bi"].reshape(1, -1)
    wo2 = p["wo2"].T                                                  # [FF, H]
    bo2 = p["bo2"].reshape(1, H)
    ln1_g = p["ln1_g"].reshape(1, H)
    ln1_b = p["ln1_b"].reshape(1, H)
    ln2_g = p["ln2_g"].reshape(1, H)
    ln2_b = p["ln2_b"].reshape(1, H)
    FF = wi.shape[1]

    const = lambda b: (0, 0)          # weights: loaded once, VMEM-resident
    in_specs = [
        pl.BlockSpec((pl.Squeezed(), S, H), lambda b: (b, 0, 0)),     # x
        pl.BlockSpec((H, 3 * H), const),
        pl.BlockSpec((1, 3 * H), const),
        pl.BlockSpec((H, H), const),
        pl.BlockSpec((1, H), const),
        pl.BlockSpec((1, H), const),
        pl.BlockSpec((1, H), const),
        pl.BlockSpec((H, FF), const),
        pl.BlockSpec((1, FF), const),
        pl.BlockSpec((FF, H), const),
        pl.BlockSpec((1, H), const),
        pl.BlockSpec((1, H), const),
        pl.BlockSpec((1, H), const),
    ]
    out_specs = pl.BlockSpec((1, S, H), lambda b: (b, 0, 0))

    return pl.pallas_call(
        functools.partial(_bert_layer_kernel,
                          num_heads=num_heads, head_dim=head_dim),
        out_shape=jax.ShapeDtypeStruct((B, S, H), jnp.float32),
        grid_spec=pltpu.PrefetchScalarGridSpec(
            num_scalar_prefetch=0,
            grid=(B,),
            in_specs=in_specs,
            out_specs=out_specs),
        compiler_params=pltpu.CompilerParams(
            dimension_semantics=("parallel",)),       # dual-TC on v7x
    )(x, wqkv, bqkv, wo, bo, ln1_g, ln1_b, wi, bi, wo2, bo2, ln2_g, ln2_b)


@functools.partial(jax.jit, static_argnames=("num_heads",))
def style_encoder_forward(hidden, layer_params, num_heads):
    """StyleEncoder.forward equivalent on pre-embedded hidden states.

    TODO(synk): the embedding stage (wordpiece/position/segment lookup +
    embedding LayerNorm) and pretrained weights are not kernelized; `hidden`
    stands in for the embedding output.
    """
    for p in layer_params:
        hidden = bert_layer(hidden, p, num_heads=num_heads)
    return hidden[:, 0, :]            # cls_hidden_state = outputs[0][:, 0, :]


# ----------------------------- pure-JAX reference ---------------------------

def _layer_norm_ref(x, g, b):
    mu = x.mean(-1, keepdims=True)
    var = ((x - mu) ** 2).mean(-1, keepdims=True)
    return (x - mu) / jnp.sqrt(var + _LN_EPS) * g + b


def _bert_layer_ref(x, p, num_heads):
    B, S, H = x.shape
    hd = H // num_heads
    q = x @ p["wq"].T + p["bq"]
    k = x @ p["wk"].T + p["bk"]
    v = x @ p["wv"].T + p["bv"]
    split = lambda t: t.reshape(B, S, num_heads, hd).transpose(0, 2, 1, 3)
    q, k, v = split(q), split(k), split(v)
    s = jnp.einsum("bhqd,bhkd->bhqk", q, k) / math.sqrt(hd)
    attn = jax.nn.softmax(s, axis=-1)
    ctx = jnp.einsum("bhqk,bhkd->bhqd", attn, v)
    ctx = ctx.transpose(0, 2, 1, 3).reshape(B, S, H)
    h1 = _layer_norm_ref(ctx @ p["wo"].T + p["bo"] + x, p["ln1_g"], p["ln1_b"])
    inter = _gelu_tanh(h1 @ p["wi"].T + p["bi"])
    ffn = inter @ p["wo2"].T + p["bo2"]
    return _layer_norm_ref(ffn + h1, p["ln2_g"], p["ln2_b"])


def _style_encoder_ref(hidden, layer_params, num_heads):
    for p in layer_params:
        hidden = _bert_layer_ref(hidden, p, num_heads)
    return hidden[:, 0, :]


# --------------------------------- demo --------------------------------------

if __name__ == "__main__":
    # Small BERT-like shapes: batch=2, seq=8, hidden=32, heads=2, ffn=128, layers=2.
    B, S, H, NH, FF, NL = 2, 8, 32, 2, 128, 2

    rng = jax.random.PRNGKey(0)

    def make_layer(key):
        ks = jax.random.split(key, 16)
        n = lambda k, shp, s=0.1: jax.random.normal(k, shp, jnp.float32) * s
        return {
            # nn.Linear convention: weight [out, in], bias [out]
            "wq": n(ks[0], (H, H)), "bq": n(ks[1], (H,)),
            "wk": n(ks[2], (H, H)), "bk": n(ks[3], (H,)),
            "wv": n(ks[4], (H, H)), "bv": n(ks[5], (H,)),
            "wo": n(ks[6], (H, H)), "bo": n(ks[7], (H,)),
            "ln1_g": 1.0 + n(ks[8], (H,)), "ln1_b": n(ks[9], (H,)),
            "wi": n(ks[10], (FF, H)), "bi": n(ks[11], (FF,)),
            "wo2": n(ks[12], (H, FF)), "bo2": n(ks[13], (H,)),
            "ln2_g": 1.0 + n(ks[14], (H,)), "ln2_b": n(ks[15], (H,)),
        }

    keys = jax.random.split(rng, 1 + NL)
    hidden = jax.random.normal(keys[0], (B, S, H), jnp.float32)  # embedding-output stand-in
    layer_params = tuple(make_layer(k) for k in keys[1:])

    cls = style_encoder_forward(hidden, layer_params, num_heads=NH)
    jax.block_until_ready(cls)
    assert cls.shape == (B, H)

    cls_ref = _style_encoder_ref(hidden, layer_params, NH)
    # approx=True reciprocal (EUP vrcp) in the softmax denominator -> compare
    # at ~5e-3 instead of exact-divide 1e-5 level.
    np.testing.assert_allclose(np.asarray(cls), np.asarray(cls_ref),
                               rtol=5e-3, atol=5e-3)

    print("KERNEL_OK")
</pallas_src>

<mosaic_0001>
module attributes {stable_mosaic.version = 11 : i64} {
  func.func @_bert_layer_kernel(%arg0: i32, %arg1: memref<1x8x32xf32, #tpu.memory_space<vmem>>, %arg2: memref<32x96xf32, #tpu.memory_space<vmem>>, %arg3: memref<1x96xf32, #tpu.memory_space<vmem>>, %arg4: memref<32x32xf32, #tpu.memory_space<vmem>>, %arg5: memref<1x32xf32, #tpu.memory_space<vmem>>, %arg6: memref<1x32xf32, #tpu.memory_space<vmem>>, %arg7: memref<1x32xf32, #tpu.memory_space<vmem>>, %arg8: memref<32x128xf32, #tpu.memory_space<vmem>>, %arg9: memref<1x128xf32, #tpu.memory_space<vmem>>, %arg10: memref<128x32xf32, #tpu.memory_space<vmem>>, %arg11: memref<1x32xf32, #tpu.memory_space<vmem>>, %arg12: memref<1x32xf32, #tpu.memory_space<vmem>>, %arg13: memref<1x32xf32, #tpu.memory_space<vmem>>, %arg14: memref<1x8x32xf32, #tpu.memory_space<vmem>>) attributes {dimension_semantics = [#tpu.dimension_semantics<parallel>], iteration_bounds = array<i64: 2>, scalar_prefetch = 0 : i64, scratch_operands = 0 : i64, tpu.core_type = #tpu.core_type<tc>, window_params = [{transform_indices = @transform_0, window_bounds = array<i64: 1, 8, 32>}, {pipeline_mode = #tpu.pipeline_mode<synchronous>, transform_indices = @transform_1, window_bounds = array<i64: 32, 96>}, {pipeline_mode = #tpu.pipeline_mode<synchronous>, transform_indices = @transform_2, window_bounds = array<i64: 1, 96>}, {pipeline_mode = #tpu.pipeline_mode<synchronous>, transform_indices = @transform_3, window_bounds = array<i64: 32, 32>}, {pipeline_mode = #tpu.pipeline_mode<synchronous>, transform_indices = @transform_4, window_bounds = array<i64: 1, 32>}, {pipeline_mode = #tpu.pipeline_mode<synchronous>, transform_indices = @transform_5, window_bounds = array<i64: 1, 32>}, {pipeline_mode = #tpu.pipeline_mode<synchronous>, transform_indices = @transform_6, window_bounds = array<i64: 1, 32>}, {pipeline_mode = #tpu.pipeline_mode<synchronous>, transform_indices = @transform_7, window_bounds = array<i64: 32, 128>}, {pipeline_mode = #tpu.pipeline_mode<synchronous>, transform_indices = @transform_8, window_bounds = array<i64: 1, 128>}, {pipeline_mode = #tpu.pipeline_mode<synchronous>, transform_indices = @transform_9, window_bounds = array<i64: 128, 32>}, {pipeline_mode = #tpu.pipeline_mode<synchronous>, transform_indices = @transform_10, window_bounds = array<i64: 1, 32>}, {pipeline_mode = #tpu.pipeline_mode<synchronous>, transform_indices = @transform_11, window_bounds = array<i64: 1, 32>}, {pipeline_mode = #tpu.pipeline_mode<synchronous>, transform_indices = @transform_12, window_bounds = array<i64: 1, 32>}, {transform_indices = @transform_13, window_bounds = array<i64: 1, 8, 32>}]} {
    %c0 = arith.constant 0 : index
    %c0_0 = arith.constant 0 : index
    %c0_1 = arith.constant 0 : index
    %0 = vector.load %arg1[%c0, %c0_0, %c0_1] : memref<1x8x32xf32, #tpu.memory_space<vmem>>, vector<1x8x32xf32>
    %1 = vector.shape_cast %0 : vector<1x8x32xf32> to vector<8x32xf32>
    %c0_2 = arith.constant 0 : index
    %c0_3 = arith.constant 0 : index
    %2 = vector.load %arg2[%c0_2, %c0_3] : memref<32x96xf32, #tpu.memory_space<vmem>>, vector<32x96xf32>
    %cst = arith.constant dense<0.000000e+00> : vector<8x96xf32>
    %3 = tpu.matmul %1, %2, %cst {dimension_numbers = #tpu.dot_dimension_numbers<[1], [0], [0], [1], [0, 0, 1, 1], [], []>} : vector<8x32xf32>, vector<32x96xf32>, vector<8x96xf32> -> vector<8x96xf32>
    %c0_4 = arith.constant 0 : index
    %c0_5 = arith.constant 0 : index
    %4 = vector.load %arg3[%c0_4, %c0_5] : memref<1x96xf32, #tpu.memory_space<vmem>>, vector<1x96xf32>
    %5 = vector.broadcast %4 : vector<1x96xf32> to vector<8x96xf32>
    %6 = arith.addf %3, %5 : vector<8x96xf32>
    %7 = vector.extract_strided_slice %6 {offsets = [0, 0], sizes = [8, 16], strides = [1, 1]} : vector<8x96xf32> to vector<8x16xf32>
    %8 = vector.extract_strided_slice %6 {offsets = [0, 32], sizes = [8, 16], strides = [1, 1]} : vector<8x96xf32> to vector<8x16xf32>
    %9 = vector.extract_strided_slice %6 {offsets = [0, 64], sizes = [8, 16], strides = [1, 1]} : vector<8x96xf32> to vector<8x16xf32>
    %cst_6 = arith.constant dense<0.000000e+00> : vector<8x8xf32>
    %10 = tpu.matmul %7, %8, %cst_6 {dimension_numbers = #tpu.dot_dimension_numbers<[1], [1], [0], [0], [0, 0, 1, 0], [], []>} : vector<8x16xf32>, vector<8x16xf32>, vector<8x8xf32> -> vector<8x8xf32>
    %cst_7 = arith.constant dense<0xFF800000> : vector<8xf32>
    %11 = vector.multi_reduction <maximumf>, %10, %cst_7 [1] : vector<8x8xf32> to vector<8xf32>
    %12 = vector.shape_cast %11 : vector<8xf32> to vector<8x1xf32>
    %13 = vector.broadcast %12 : vector<8x1xf32> to vector<8x8xf32>
    %14 = arith.subf %10, %13 : vector<8x8xf32>
    %15 = math.exp %14 : vector<8x8xf32>
    %cst_8 = arith.constant dense<0.000000e+00> : vector<8xf32>
    %16 = vector.multi_reduction <add>, %15, %cst_8 [1] : vector<8x8xf32> to vector<8xf32>
    %17 = vector.shape_cast %16 : vector<8xf32> to vector<8x1xf32>
    %18 = tpu.reciprocal %17 {approx = true} : vector<8x1xf32> -> vector<8x1xf32>
    %19 = vector.broadcast %18 : vector<8x1xf32> to vector<8x8xf32>
    %20 = arith.mulf %15, %19 : vector<8x8xf32>
    %cst_9 = arith.constant dense<0.000000e+00> : vector<8x16xf32>
    %21 = tpu.matmul %20, %9, %cst_9 {dimension_numbers = #tpu.dot_dimension_numbers<[1], [0], [0], [1], [0, 0, 1, 1], [], []>} : vector<8x8xf32>, vector<8x16xf32>, vector<8x16xf32> -> vector<8x16xf32>
    %22 = vector.extract_strided_slice %6 {offsets = [0, 16], sizes = [8, 16], strides = [1, 1]} : vector<8x96xf32> to vector<8x16xf32>
    %23 = vector.extract_strided_slice %6 {offsets = [0, 48], sizes = [8, 16], strides = [1, 1]} : vector<8x96xf32> to vector<8x16xf32>
    %24 = vector.extract_strided_slice %6 {offsets = [0, 80], sizes = [8, 16], strides = [1, 1]} : vector<8x96xf32> to vector<8x16xf32>
    %cst_10 = arith.constant dense<0.000000e+00> : vector<8x8xf32>
    %25 = tpu.matmul %22, %23, %cst_10 {dimension_numbers = #tpu.dot_dimension_numbers<[1], [1], [0], [0], [0, 0, 1, 0], [], []>} : vector<8x16xf32>, vector<8x16xf32>, vector<8x8xf32> -> vector<8x8xf32>
    %cst_11 = arith.constant dense<0xFF800000> : vector<8xf32>
    %26 = vector.multi_reduction <maximumf>, %25, %cst_11 [1] : vector<8x8xf32> to vector<8xf32>
    %27 = vector.shape_cast %26 : vector<8xf32> to vector<8x1xf32>
    %28 = vector.broadcast %27 : vector<8x1xf32> to vector<8x8xf32>
    %29 = arith.subf %25, %28 : vector<8x8xf32>
    %30 = math.exp %29 : vector<8x8xf32>
    %cst_12 = arith.constant dense<0.000000e+00> : vector<8xf32>
    %31 = vector.multi_reduction <add>, %30, %cst_12 [1] : vector<8x8xf32> to vector<8xf32>
    %32 = vector.shape_cast %31 : vector<8xf32> to vector<8x1xf32>
    %33 = tpu.reciprocal %32 {approx = true} : vector<8x1xf32> -> vector<8x1xf32>
    %34 = vector.broadcast %33 : vector<8x1xf32> to vector<8x8xf32>
    %35 = arith.mulf %30, %34 : vector<8x8xf32>
    %cst_13 = arith.constant dense<0.000000e+00> : vector<8x16xf32>
    %36 = tpu.matmul %35, %24, %cst_13 {dimension_numbers = #tpu.dot_dimension_numbers<[1], [0], [0], [1], [0, 0, 1, 1], [], []>} : vector<8x8xf32>, vector<8x16xf32>, vector<8x16xf32> -> vector<8x16xf32>
    %37 = tpu.concatenate %21, %36 in 1 : vector<8x16xf32>, vector<8x16xf32> -> vector<8x32xf32>
    %c0_14 = arith.constant 0 : index
    %c0_15 = arith.constant 0 : index
    %38 = vector.load %arg4[%c0_14, %c0_15] : memref<32x32xf32, #tpu.memory_space<vmem>>, vector<32x32xf32>
    %cst_16 = arith.constant dense<0.000000e+00> : vector<8x32xf32>
    %39 = tpu.matmul %37, %38, %cst_16 {dimension_numbers = #tpu.dot_dimension_numbers<[1], [0], [0], [1], [0, 0, 1, 1], [], []>} : vector<8x32xf32>, vector<32x32xf32>, vector<8x32xf32> -> vector<8x32xf32>
    %c0_17 = arith.constant 0 : index
    %c0_18 = arith.constant 0 : index
    %40 = vector.load %arg5[%c0_17, %c0_18] : memref<1x32xf32, #tpu.memory_space<vmem>>, vector<1x32xf32>
    %41 = vector.broadcast %40 : vector<1x32xf32> to vector<8x32xf32>
    %42 = arith.addf %39, %41 : vector<8x32xf32>
    %43 = arith.addf %42, %1 : vector<8x32xf32>
    %c0_19 = arith.constant 0 : index
    %c0_20 = arith.constant 0 : index
    %44 = vector.load %arg6[%c0_19, %c0_20] : memref<1x32xf32, #tpu.memory_space<vmem>>, vector<1x32xf32>
    %c0_21 = arith.constant 0 : index
    %c0_22 = arith.constant 0 : index
    %45 = vector.load %arg7[%c0_21, %c0_22] : memref<1x32xf32, #tpu.memory_space<vmem>>, vector<1x32xf32>
    %cst_23 = arith.constant dense<0.000000e+00> : vector<8xf32>
    %46 = vector.multi_reduction <add>, %43, %cst_23 [1] : vector<8x32xf32> to vector<8xf32>
    %47 = vector.shape_cast %46 : vector<8xf32> to vector<8x1xf32>
    %cst_24 = arith.constant 3.200000e+01 : f32
    %48 = vector.broadcast %cst_24 : f32 to vector<8x1xf32>
    %49 = arith.divf %47, %48 : vector<8x1xf32>
    %50 = vector.broadcast %49 : vector<8x1xf32> to vector<8x32xf32>
    %51 = arith.subf %43, %50 : vector<8x32xf32>
    %52 = arith.mulf %51, %51 : vector<8x32xf32>
    %cst_25 = arith.constant dense<0.000000e+00> : vector<8xf32>
    %53 = vector.multi_reduction <add>, %52, %cst_25 [1] : vector<8x32xf32> to vector<8xf32>
    %54 = vector.shape_cast %53 : vector<8xf32> to vector<8x1xf32>
    %cst_26 = arith.constant 3.200000e+01 : f32
    %55 = vector.broadcast %cst_26 : f32 to vector<8x1xf32>
    %56 = arith.divf %54, %55 : vector<8x1xf32>
    %cst_27 = arith.constant 9.99999996E-13 : f32
    %57 = vector.broadcast %cst_27 : f32 to vector<8x1xf32>
    %58 = arith.addf %56, %57 : vector<8x1xf32>
    %59 = math.rsqrt %58 : vector<8x1xf32>
    %60 = vector.broadcast %59 : vector<8x1xf32> to vector<8x32xf32>
    %61 = arith.mulf %51, %60 : vector<8x32xf32>
    %62 = vector.broadcast %44 : vector<1x32xf32> to vector<8x32xf32>
    %63 = arith.mulf %61, %62 : vector<8x32xf32>
    %64 = vector.broadcast %45 : vector<1x32xf32> to vector<8x32xf32>
    %65 = arith.addf %63, %64 : vector<8x32xf32>
    %c0_28 = arith.constant 0 : index
    %c0_29 = arith.constant 0 : index
    %66 = vector.load %arg8[%c0_28, %c0_29] : memref<32x128xf32, #tpu.memory_space<vmem>>, vector<32x128xf32>
    %cst_30 = arith.constant dense<0.000000e+00> : vector<8x128xf32>
    %67 = tpu.matmul %65, %66, %cst_30 {dimension_numbers = #tpu.dot_dimension_numbers<[1], [0], [0], [1], [0, 0, 1, 1], [], []>} : vector<8x32xf32>, vector<32x128xf32>, vector<8x128xf32> -> vector<8x128xf32>
    %c0_31 = arith.constant 0 : index
    %c0_32 = arith.constant 0 : index
    %68 = vector.load %arg9[%c0_31, %c0_32] : memref<1x128xf32, #tpu.memory_space<vmem>>, vector<1x128xf32>
    %69 = vector.broadcast %68 : vector<1x128xf32> to vector<8x128xf32>
    %70 = arith.addf %67, %69 : vector<8x128xf32>
    %cst_33 = arith.constant 5.000000e-01 : f32
    %71 = vector.broadcast %cst_33 : f32 to vector<8x128xf32>
    %72 = arith.mulf %71, %70 : vector<8x128xf32>
    %cst_34 = arith.constant 4.471500e-02 : f32
    %73 = vector.broadcast %cst_34 : f32 to vector<8x128xf32>
    %74 = arith.mulf %73, %70 : vector<8x128xf32>
    %75 = arith.mulf %74, %70 : vector<8x128xf32>
    %76 = arith.mulf %75, %70 : vector<8x128xf32>
    %77 = arith.addf %70, %76 : vector<8x128xf32>
    %cst_35 = arith.constant 0.797884583 : f32
    %78 = vector.broadcast %cst_35 : f32 to vector<8x128xf32>
    %79 = arith.mulf %78, %77 : vector<8x128xf32>
    %80 = math.tanh %79 : vector<8x128xf32>
    %cst_36 = arith.constant 1.000000e+00 : f32
    %81 = vector.broadcast %cst_36 : f32 to vector<8x128xf32>
    %82 = arith.addf %81, %80 : vector<8x128xf32>
    %83 = arith.mulf %72, %82 : vector<8x128xf32>
    %c0_37 = arith.constant 0 : index
    %c0_38 = arith.constant 0 : index
    %84 = vector.load %arg10[%c0_37, %c0_38] : memref<128x32xf32, #tpu.memory_space<vmem>>, vector<128x32xf32>
    %cst_39 = arith.constant dense<0.000000e+00> : vector<8x32xf32>
    %85 = tpu.matmul %83, %84, %cst_39 {dimension_numbers = #tpu.dot_dimension_numbers<[1], [0], [0], [1], [0, 0, 1, 1], [], []>} : vector<8x128xf32>, vector<128x32xf32>, vector<8x32xf32> -> vector<8x32xf32>
    %c0_40 = arith.constant 0 : index
    %c0_41 = arith.constant 0 : index
    %86 = vector.load %arg11[%c0_40, %c0_41] : memref<1x32xf32, #tpu.memory_space<vmem>>, vector<1x32xf32>
    %87 = vector.broadcast %86 : vector<1x32xf32> to vector<8x32xf32>
    %88 = arith.addf %85, %87 : vector<8x32xf32>
    %89 = arith.addf %88, %65 : vector<8x32xf32>
    %c0_42 = arith.constant 0 : index
    %c0_43 = arith.constant 0 : index
    %90 = vector.load %arg12[%c0_42, %c0_43] : memref<1x32xf32, #tpu.memory_space<vmem>>, vector<1x32xf32>
    %c0_44 = arith.constant 0 : index
    %c0_45 = arith.constant 0 : index
    %91 = vector.load %arg13[%c0_44, %c0_45] : memref<1x32xf32, #tpu.memory_space<vmem>>, vector<1x32xf32>
    %cst_46 = arith.constant dense<0.000000e+00> : vector<8xf32>
    %92 = vector.multi_reduction <add>, %89, %cst_46 [1] : vector<8x32xf32> to vector<8xf32>
    %93 = vector.shape_cast %92 : vector<8xf32> to vector<8x1xf32>
    %cst_47 = arith.constant 3.200000e+01 : f32
    %94 = vector.broadcast %cst_47 : f32 to vector<8x1xf32>
    %95 = arith.divf %93, %94 : vector<8x1xf32>
    %96 = vector.broadcast %95 : vector<8x1xf32> to vector<8x32xf32>
    %97 = arith.subf %89, %96 : vector<8x32xf32>
    %98 = arith.mulf %97, %97 : vector<8x32xf32>
    %cst_48 = arith.constant dense<0.000000e+00> : vector<8xf32>
    %99 = vector.multi_reduction <add>, %98, %cst_48 [1] : vector<8x32xf32> to vector<8xf32>
    %100 = vector.shape_cast %99 : vector<8xf32> to vector<8x1xf32>
    %cst_49 = arith.constant 3.200000e+01 : f32
    %101 = vector.broadcast %cst_49 : f32 to vector<8x1xf32>
    %102 = arith.divf %100, %101 : vector<8x1xf32>
    %cst_50 = arith.constant 9.99999996E-13 : f32
    %103 = vector.broadcast %cst_50 : f32 to vector<8x1xf32>
    %104 = arith.addf %102, %103 : vector<8x1xf32>
    %105 = math.rsqrt %104 : vector<8x1xf32>
    %106 = vector.broadcast %105 : vector<8x1xf32> to vector<8x32xf32>
    %107 = arith.mulf %97, %106 : vector<8x32xf32>
    %108 = vector.broadcast %90 : vector<1x32xf32> to vector<8x32xf32>
    %109 = arith.mulf %107, %108 : vector<8x32xf32>
    %110 = vector.broadcast %91 : vector<1x32xf32> to vector<8x32xf32>
    %111 = arith.addf %109, %110 : vector<8x32xf32>
    %c0_51 = arith.constant 0 : index
    %c0_52 = arith.constant 0 : index
    %c0_53 = arith.constant 0 : index
    %112 = vector.load %arg14[%c0_51, %c0_52, %c0_53] : memref<1x8x32xf32, #tpu.memory_space<vmem>>, vector<1x8x32xf32>
    %113 = vector.shape_cast %112 : vector<1x8x32xf32> to vector<8x32xf32>
    %114 = vector.shape_cast %111 : vector<8x32xf32> to vector<1x8x32xf32>
    tpu.vector_store %arg14[%c0_51, %c0_52, %c0_53], %114 {strides = array<i32>} : memref<1x8x32xf32, #tpu.memory_space<vmem>>, vector<1x8x32xf32>,
    return
  }
  func.func @transform_0(%arg0: i32) -> (i32, i32, i32) {
    %c0_i32 = arith.constant 0 : i32
    %c0_i32_0 = arith.constant 0 : i32
    %c0_i32_1 = arith.constant 0 : i32
    return %arg0, %c0_i32, %c0_i32_0 : i32, i32, i32
  }
  func.func @transform_1(%arg0: i32) -> (i32, i32) {
    %c0_i32 = arith.constant 0 : i32
    %c0_i32_0 = arith.constant 0 : i32
    %c0_i32_1 = arith.constant 0 : i32
    return %c0_i32, %c0_i32_0 : i32, i32
  }
  func.func @transform_2(%arg0: i32) -> (i32, i32) {
    %c0_i32 = arith.constant 0 : i32
    %c0_i32_0 = arith.constant 0 : i32
    %c0_i32_1 = arith.constant 0 : i32
    return %c0_i32, %c0_i32_0 : i32, i32
  }
  func.func @transform_3(%arg0: i32) -> (i32, i32) {
    %c0_i32 = arith.constant 0 : i32
    %c0_i32_0 = arith.constant 0 : i32
    %c0_i32_1 = arith.constant 0 : i32
    return %c0_i32, %c0_i32_0 : i32, i32
  }
  func.func @transform_4(%arg0: i32) -> (i32, i32) {
    %c0_i32 = arith.constant 0 : i32
    %c0_i32_0 = arith.constant 0 : i32
    %c0_i32_1 = arith.constant 0 : i32
    return %c0_i32, %c0_i32_0 : i32, i32
  }
  func.func @transform_5(%arg0: i32) -> (i32, i32) {
    %c0_i32 = arith.constant 0 : i32
    %c0_i32_0 = arith.constant 0 : i32
    %c0_i32_1 = arith.constant 0 : i32
    return %c0_i32, %c0_i32_0 : i32, i32
  }
  func.func @transform_6(%arg0: i32) -> (i32, i32) {
    %c0_i32 = arith.constant 0 : i32
    %c0_i32_0 = arith.constant 0 : i32
    %c0_i32_1 = arith.constant 0 : i32
    return %c0_i32, %c0_i32_0 : i32, i32
  }
  func.func @transform_7(%arg0: i32) -> (i32, i32) {
    %c0_i32 = arith.constant 0 : i32
    %c0_i32_0 = arith.constant 0 : i32
    %c0_i32_1 = arith.constant 0 : i32
    return %c0_i32, %c0_i32_0 : i32, i32
  }
  func.func @transform_8(%arg0: i32) -> (i32, i32) {
    %c0_i32 = arith.constant 0 : i32
    %c0_i32_0 = arith.constant 0 : i32
    %c0_i32_1 = arith.constant 0 : i32
    return %c0_i32, %c0_i32_0 : i32, i32
  }
  func.func @transform_9(%arg0: i32) -> (i32, i32) {
    %c0_i32 = arith.constant 0 : i32
    %c0_i32_0 = arith.constant 0 : i32
    %c0_i32_1 = arith.constant 0 : i32
    return %c0_i32, %c0_i32_0 : i32, i32
  }
  func.func @transform_10(%arg0: i32) -> (i32, i32) {
    %c0_i32 = arith.constant 0 : i32
    %c0_i32_0 = arith.constant 0 : i32
    %c0_i32_1 = arith.constant 0 : i32
    return %c0_i32, %c0_i32_0 : i32, i32
  }
  func.func @transform_11(%arg0: i32) -> (i32, i32) {
    %c0_i32 = arith.constant 0 : i32
    %c0_i32_0 = arith.constant 0 : i32
    %c0_i32_1 = arith.constant 0 : i32
    return %c0_i32, %c0_i32_0 : i32, i32
  }
  func.func @transform_12(%arg0: i32) -> (i32, i32) {
    %c0_i32 = arith.constant 0 : i32
    %c0_i32_0 = arith.constant 0 : i32
    %c0_i32_1 = arith.constant 0 : i32
    return %c0_i32, %c0_i32_0 : i32, i32
  }
  func.func @transform_13(%arg0: i32) -> (i32, i32, i32) {
    %c0_i32 = arith.constant 0 : i32
    %c0_i32_0 = arith.constant 0 : i32
    %c0_i32_1 = arith.constant 0 : i32
    return %arg0, %c0_i32, %c0_i32_0 : i32, i32, i32
  }
}

</mosaic_0001>

<llo_original>
// kernel: style_encoder_forward.2
$region0: #{style_encoder_forward.2}
  #allocation0 [shape = 'u32[]', space=smem, size = 0x4, offset = 0x4, fixed_abs, tag = 'smem constant byte address 0x4 - core index']
  #allocation1 [shape = 'u32[144,128]{1,0:T(1,128)}', space=vmem, size = 0x12000, scoped, tag = 'internal scratch']
  %s0 = inlined_call_operand.vmem [shape: f32[2,8,32], index: 0, kind: input, shape index: {}]
  %s1 = inlined_call_operand.vmem [shape: f32[32,96], index: 1, kind: input, shape index: {}]
  %s2 = inlined_call_operand.vmem [shape: f32[1,96], index: 2, kind: input, shape index: {}]
  %s3 = inlined_call_operand.vmem [shape: f32[32,32], index: 3, kind: input, shape index: {}]
  %s4 = inlined_call_operand.vmem [shape: f32[1,32], index: 4, kind: input, shape index: {}]
  %s5 = inlined_call_operand.vmem [shape: f32[1,32], index: 5, kind: input, shape index: {}]
  %s6 = inlined_call_operand.vmem [shape: f32[1,32], index: 6, kind: input, shape index: {}]
  %s7 = inlined_call_operand.vmem [shape: f32[32,128], index: 7, kind: input, shape index: {}]
  %s8 = inlined_call_operand.vmem [shape: f32[1,128], index: 8, kind: input, shape index: {}]
  %s9 = inlined_call_operand.vmem [shape: f32[128,32], index: 9, kind: input, shape index: {}]
  %s10 = inlined_call_operand.vmem [shape: f32[1,32], index: 10, kind: input, shape index: {}]
  %s11 = inlined_call_operand.vmem [shape: f32[1,32], index: 11, kind: input, shape index: {}]
  %s12 = inlined_call_operand.vmem [shape: f32[1,32], index: 12, kind: input, shape index: {}]
  %s13 = inlined_call_operand.vmem [shape: f32[2,8,32], index: 13, kind: output, shape index: {}]
  %s14 = sld [smem:[#allocation0]]
  $region85: #{style_encoder_forward.2} parent=0
    _
  %s16 = ssub.s32 1, %s14
  %s17 = scalar_select 0, %s16, %s14
  loop: start=0, step=1, limit=4
  $region2: #{style_encoder_forward.2} parent=0 // loop_pre_header
    _
  $region3: #{style_encoder_forward.2} parent=0 // loop_header
    %s19 = sphi 0, %s23
    %p20 = scmp.ge.s32.totalorder %s19, 4
    %s29 = sphi 0, %s31
    %s32 = sphi 0, %s29
    %s33 = sphi 0, %s32
    %s49 = sphi 0, %s33
    %s53 = sphi 0, %s53
    %s55 = sphi 0, %s53
    %s56 = sphi 0, %s55
    %s70 = sphi 0, %s56
    %s74 = sphi 0, %s74
    %s76 = sphi 0, %s74
    %s77 = sphi 0, %s76
    %s91 = sphi 0, %s77
    %s95 = sphi 0, %s95
    %s97 = sphi 0, %s95
    %s98 = sphi 0, %s97
    %s112 = sphi 0, %s98
    %s116 = sphi 0, %s116
    %s118 = sphi 0, %s116
    %s119 = sphi 0, %s118
    %s133 = sphi 0, %s119
    %s137 = sphi 0, %s137
    %s139 = sphi 0, %s137
    %s140 = sphi 0, %s139
    %s154 = sphi 0, %s140
    %s158 = sphi 0, %s158
    %s160 = sphi 0, %s158
    %s161 = sphi 0, %s160
    %s175 = sphi 0, %s161
    %s179 = sphi 0, %s179
    %s181 = sphi 0, %s179
    %s182 = sphi 0, %s181
    %s196 = sphi 0, %s182
    %s200 = sphi 0, %s200
    %s202 = sphi 0, %s200
    %s203 = sphi 0, %s202
    %s217 = sphi 0, %s203
    %s221 = sphi 0, %s221
    %s223 = sphi 0, %s221
    %s224 = sphi 0, %s223
    %s238 = sphi 0, %s224
    %s242 = sphi 0, %s242
    %s244 = sphi 0, %s242
    %s245 = sphi 0, %s244
    %s259 = sphi 0, %s245
    %s263 = sphi 0, %s263
    %s265 = sphi 0, %s263
    %s266 = sphi 0, %s265
    %s280 = sphi 0, %s266
    %s284 = sphi 0, %s284
    %s286 = sphi 0, %s284
    %s287 = sphi 0, %s286
    %s301 = sphi 0, %s287
    %s307 = sphi 0, %s309
    %s310 = sphi 0, %s307
    %s311 = sphi 0, %s310
    %s327 = sphi 0, %s311
  $region4: #{style_encoder_forward.2} parent=0 // loop_header_branch
    %22 = sbr.rel (%p20) target = $region8
  $region5: #{style_encoder_forward.2} parent=0 // loop_body
    %s24 = ssub.s32 %s19, 1
    %s25 = ssub.s32 %s19, 2
    %s26 = sadd.s32 %s19, 1
    %s27 = ssub.s32 %s19, %s26
    %p28 = scmp.eq.s32.totalorder %s27, 0
    %s30 = sadd.s32 %s29, 1
    %s31 = scalar_select %p28, %s29, %s30
    %p34 = pneg %p28
    %p35 = scmp.eq.s32.totalorder %s19, 1
    %p36 = por %p34, %p35
    %p37 = scmp.ne.s32.totalorder %s29, %s32
    %p38 = scmp.eq.s32.totalorder %s19, 0
    %p39 = por %p37, %p38
    %p40 = scmp.ne.s32.totalorder %s29, %s32
    %p41 = scmp.eq.s32.totalorder %s24, 1
    %p42 = por %p40, %p41
    %p43 = scmp.ne.s32.totalorder %s32, %s33
    %p44 = scmp.eq.s32.totalorder %s24, 0
    %p45 = por %p43, %p44
    %p46 = scmp.ne.s32.totalorder %s32, %s33
    %p47 = scmp.eq.s32.totalorder %s25, 1
    %p48 = por %p46, %p47
    %p50 = scmp.ne.s32.totalorder %s33, %s49
    %p51 = scmp.eq.s32.totalorder %s25, 0
    %p52 = por %p50, %p51
    %s54 = sadd.s32 %s53, 1
    %p57 = scmp.eq.s32.totalorder %s19, 1
    %p58 = scmp.ne.s32.totalorder %s53, %s55
    %p59 = scmp.eq.s32.totalorder %s19, 0
    %p60 = por %p58, %p59
    %p61 = scmp.ne.s32.totalorder %s53, %s55
    %p62 = scmp.eq.s32.totalorder %s24, 1
    %p63 = por %p61, %p62
    %p64 = scmp.ne.s32.totalorder %s55, %s56
    %p65 = scmp.eq.s32.totalorder %s24, 0
    %p66 = por %p64, %p65
    %p67 = scmp.ne.s32.totalorder %s55, %s56
    %p68 = scmp.eq.s32.totalorder %s25, 1
    %p69 = por %p67, %p68
    %p71 = scmp.ne.s32.totalorder %s56, %s70
    %p72 = scmp.eq.s32.totalorder %s25, 0
    %p73 = por %p71, %p72
    %s75 = sadd.s32 %s74, 1
    %p78 = scmp.eq.s32.totalorder %s19, 1
    %p79 = scmp.ne.s32.totalorder %s74, %s76
    %p80 = scmp.eq.s32.totalorder %s19, 0
    %p81 = por %p79, %p80
    %p82 = scmp.ne.s32.totalorder %s74, %s76
    %p83 = scmp.eq.s32.totalorder %s24, 1
    %p84 = por %p82, %p83
    %p85 = scmp.ne.s32.totalorder %s76, %s77
    %p86 = scmp.eq.s32.totalorder %s24, 0
    %p87 = por %p85, %p86
    %p88 = scmp.ne.s32.totalorder %s76, %s77
    %p89 = scmp.eq.s32.totalorder %s25, 1
    %p90 = por %p88, %p89
    %p92 = scmp.ne.s32.totalorder %s77, %s91
    %p93 = scmp.eq.s32.totalorder %s25, 0
    %p94 = por %p92, %p93
    %s96 = sadd.s32 %s95, 1
    %p99 = scmp.eq.s32.totalorder %s19, 1
    %p100 = scmp.ne.s32.totalorder %s95, %s97
    %p101 = scmp.eq.s32.totalorder %s19, 0
    %p102 = por %p100, %p101
    %p103 = scmp.ne.s32.totalorder %s95, %s97
    %p104 = scmp.eq.s32.totalorder %s24, 1
    %p105 = por %p103, %p104
    %p106 = scmp.ne.s32.totalorder %s97, %s98
    %p107 = scmp.eq.s32.totalorder %s24, 0
    %p108 = por %p106, %p107
    %p109 = scmp.ne.s32.totalorder %s97, %s98
    %p110 = scmp.eq.s32.totalorder %s25, 1
    %p111 = por %p109, %p110
    %p113 = scmp.ne.s32.totalorder %s98, %s112
    %p114 = scmp.eq.s32.totalorder %s25, 0
    %p115 = por %p113, %p114
    %s117 = sadd.s32 %s116, 1
    %p120 = scmp.eq.s32.totalorder %s19, 1
    %p121 = scmp.ne.s32.totalorder %s116, %s118
    %p122 = scmp.eq.s32.totalorder %s19, 0
    %p123 = por %p121, %p122
    %p124 = scmp.ne.s32.totalorder %s116, %s118
    %p125 = scmp.eq.s32.totalorder %s24, 1
    %p126 = por %p124, %p125
    %p127 = scmp.ne.s32.totalorder %s118, %s119
    %p128 = scmp.eq.s32.totalorder %s24, 0
    %p129 = por %p127, %p128
    %p130 = scmp.ne.s32.totalorder %s118, %s119
    %p131 = scmp.eq.s32.totalorder %s25, 1
    %p132 = por %p130, %p131
    %p134 = scmp.ne.s32.totalorder %s119, %s133
    %p135 = scmp.eq.s32.totalorder %s25, 0
    %p136 = por %p134, %p135
    %s138 = sadd.s32 %s137, 1
    %p141 = scmp.eq.s32.totalorder %s19, 1
    %p142 = scmp.ne.s32.totalorder %s137, %s139
    %p143 = scmp.eq.s32.totalorder %s19, 0
    %p144 = por %p142, %p143
    %p145 = scmp.ne.s32.totalorder %s137, %s139
    %p146 = scmp.eq.s32.totalorder %s24, 1
    %p147 = por %p145, %p146
    %p148 = scmp.ne.s32.totalorder %s139, %s140
    %p149 = scmp.eq.s32.totalorder %s24, 0
    %p150 = por %p148, %p149
    %p151 = scmp.ne.s32.totalorder %s139, %s140
    %p152 = scmp.eq.s32.totalorder %s25, 1
    %p153 = por %p151, %p152
    %p155 = scmp.ne.s32.totalorder %s140, %s154
    %p156 = scmp.eq.s32.totalorder %s25, 0
    %p157 = por %p155, %p156
    %s159 = sadd.s32 %s158, 1
    %p162 = scmp.eq.s32.totalorder %s19, 1
    %p163 = scmp.ne.s32.totalorder %s158, %s160
    %p164 = scmp.eq.s32.totalorder %s19, 0
    %p165 = por %p163, %p164
    %p166 = scmp.ne.s32.totalorder %s158, %s160
    %p167 = scmp.eq.s32.totalorder %s24, 1
    %p168 = por %p166, %p167
    %p169 = scmp.ne.s32.totalorder %s160, %s161
    %p170 = scmp.eq.s32.totalorder %s24, 0
    %p171 = por %p169, %p170
    %p172 = scmp.ne.s32.totalorder %s160, %s161
    %p173 = scmp.eq.s32.totalorder %s25, 1
    %p174 = por %p172, %p173
    %p176 = scmp.ne.s32.totalorder %s161, %s175
    %p177 = scmp.eq.s32.totalorder %s25, 0
    %p178 = por %p176, %p177
    %s180 = sadd.s32 %s179, 1
    %p183 = scmp.eq.s32.totalorder %s19, 1
    %p184 = scmp.ne.s32.totalorder %s179, %s181
    %p185 = scmp.eq.s32.totalorder %s19, 0
    %p186 = por %p184, %p185
    %p187 = scmp.ne.s32.totalorder %s179, %s181
    %p188 = scmp.eq.s32.totalorder %s24, 1
    %p189 = por %p187, %p188
    %p190 = scmp.ne.s32.totalorder %s181, %s182
    %p191 = scmp.eq.s32.totalorder %s24, 0
    %p192 = por %p190, %p191
    %p193 = scmp.ne.s32.totalorder %s181, %s182
    %p194 = scmp.eq.s32.totalorder %s25, 1
    %p195 = por %p193, %p194
    %p197 = scmp.ne.s32.totalorder %s182, %s196
    %p198 = scmp.eq.s32.totalorder %s25, 0
    %p199 = por %p197, %p198
    %s201 = sadd.s32 %s200, 1
    %p204 = scmp.eq.s32.totalorder %s19, 1
    %p205 = scmp.ne.s32.totalorder %s200, %s202
    %p206 = scmp.eq.s32.totalorder %s19, 0
    %p207 = por %p205, %p206
    %p208 = scmp.ne.s32.totalorder %s200, %s202
    %p209 = scmp.eq.s32.totalorder %s24, 1
    %p210 = por %p208, %p209
    %p211 = scmp.ne.s32.totalorder %s202, %s203
    %p212 = scmp.eq.s32.totalorder %s24, 0
    %p213 = por %p211, %p212
    %p214 = scmp.ne.s32.totalorder %s202, %s203
    %p215 = scmp.eq.s32.totalorder %s25, 1
    %p216 = por %p214, %p215
    %p218 = scmp.ne.s32.totalorder %s203, %s217
    %p219 = scmp.eq.s32.totalorder %s25, 0
    %p220 = por %p218, %p219
    %s222 = sadd.s32 %s221, 1
    %p225 = scmp.eq.s32.totalorder %s19, 1
    %p226 = scmp.ne.s32.totalorder %s221, %s223
    %p227 = scmp.eq.s32.totalorder %s19, 0
    %p228 = por %p226, %p227
    %p229 = scmp.ne.s32.totalorder %s221, %s223
    %p230 = scmp.eq.s32.totalorder %s24, 1
    %p231 = por %p229, %p230
    %p232 = scmp.ne.s32.totalorder %s223, %s224
    %p233 = scmp.eq.s32.totalorder %s24, 0
    %p234 = por %p232, %p233
    %p235 = scmp.ne.s32.totalorder %s223, %s224
    %p236 = scmp.eq.s32.totalorder %s25, 1
    %p237 = por %p235, %p236
    %p239 = scmp.ne.s32.totalorder %s224, %s238
    %p240 = scmp.eq.s32.totalorder %s25, 0
    %p241 = por %p239, %p240
    %s243 = sadd.s32 %s242, 1
    %p246 = scmp.eq.s32.totalorder %s19, 1
    %p247 = scmp.ne.s32.totalorder %s242, %s244
    %p248 = scmp.eq.s32.totalorder %s19, 0
    %p249 = por %p247, %p248
    %p250 = scmp.ne.s32.totalorder %s242, %s244
    %p251 = scmp.eq.s32.totalorder %s24, 1
    %p252 = por %p250, %p251
    %p253 = scmp.ne.s32.totalorder %s244, %s245
    %p254 = scmp.eq.s32.totalorder %s24, 0
    %p255 = por %p253, %p254
    %p256 = scmp.ne.s32.totalorder %s244, %s245
    %p257 = scmp.eq.s32.totalorder %s25, 1
    %p258 = por %p256, %p257
    %p260 = scmp.ne.s32.totalorder %s245, %s259
    %p261 = scmp.eq.s32.totalorder %s25, 0
    %p262 = por %p260, %p261
    %s264 = sadd.s32 %s263, 1
    %p267 = scmp.eq.s32.totalorder %s19, 1
    %p268 = scmp.ne.s32.totalorder %s263, %s265
    %p269 = scmp.eq.s32.totalorder %s19, 0
    %p270 = por %p268, %p269
    %p271 = scmp.ne.s32.totalorder %s263, %s265
    %p272 = scmp.eq.s32.totalorder %s24, 1
    %p273 = por %p271, %p272
    %p274 = scmp.ne.s32.totalorder %s265, %s266
    %p275 = scmp.eq.s32.totalorder %s24, 0
    %p276 = por %p274, %p275
    %p277 = scmp.ne.s32.totalorder %s265, %s266
    %p278 = scmp.eq.s32.totalorder %s25, 1
    %p279 = por %p277, %p278
    %p281 = scmp.ne.s32.totalorder %s266, %s280
    %p282 = scmp.eq.s32.totalorder %s25, 0
    %p283 = por %p281, %p282
    %s285 = sadd.s32 %s284, 1
    %p288 = scmp.eq.s32.totalorder %s19, 1
    %p289 = scmp.ne.s32.totalorder %s284, %s286
    %p290 = scmp.eq.s32.totalorder %s19, 0
    %p291 = por %p289, %p290
    %p292 = scmp.ne.s32.totalorder %s284, %s286
    %p293 = scmp.eq.s32.totalorder %s24, 1
    %p294 = por %p292, %p293
    %p295 = scmp.ne.s32.totalorder %s286, %s287
    %p296 = scmp.eq.s32.totalorder %s24, 0
    %p297 = por %p295, %p296
    %p298 = scmp.ne.s32.totalorder %s286, %s287
    %p299 = scmp.eq.s32.totalorder %s25, 1
    %p300 = por %p298, %p299
    %p302 = scmp.ne.s32.totalorder %s287, %s301
    %p303 = scmp.eq.s32.totalorder %s25, 0
    %p304 = por %p302, %p303
    %s305 = ssub.s32 %s19, %s26
    %p306 = scmp.eq.s32.totalorder %s305, 0
    %s308 = sadd.s32 %s307, 1
    %s309 = scalar_select %p306, %s307, %s308
    %p312 = pneg %p306
    %p313 = scmp.eq.s32.totalorder %s19, 1
    %p314 = por %p312, %p313
    %p315 = scmp.ne.s32.totalorder %s307, %s310
    %p316 = scmp.eq.s32.totalorder %s19, 0
    %p317 = por %p315, %p316
    %p318 = scmp.ne.s32.totalorder %s307, %s310
    %p319 = scmp.eq.s32.totalorder %s24, 1
    %p320 = por %p318, %p319
    %p321 = scmp.ne.s32.totalorder %s310, %s311
    %p322 = scmp.eq.s32.totalorder %s24, 0
    %p323 = por %p321, %p322
    %p324 = scmp.ne.s32.totalorder %s310, %s311
    %p325 = scmp.eq.s32.totalorder %s25, 1
    %p326 = por %p324, %p325
    %p328 = scmp.ne.s32.totalorder %s311, %s327
    %p329 = scmp.eq.s32.totalorder %s25, 0
    %p330 = por %p328, %p329
    %p331 = scmp.le.s32.totalorder 1, %s19
    %p332 = scmp.lt.s32.totalorder %s19, 3
    %p333 = pnand %p331, %p332
    %p334 = pneg %p333
    // Predicated region
    $region9: #{style_encoder_forward.2} parent=5 // pred_check
      _
    $region10: #{style_encoder_forward.2} parent=5 // pred_check_branch
      %336 = sbr.rel (%p333) target = $region12
    $region11: #{style_encoder_forward.2} parent=5 // pred_region
      %s337 = ssub.s32 %s19, 1
      // Predicated region
      $region13: #{style_encoder_forward.2} parent=11 // pred_check
        %p338 = pneg %p66
      $region14: #{style_encoder_forward.2} parent=11 // pred_check_branch
        %340 = sbr.rel (%p338) target = $region16
      $region15: #{style_encoder_forward.2} parent=11 // pred_region
        _
      $region16: #{style_encoder_forward.2} parent=11 // pred_fallthru
        _
      // Predicated region
      $region17: #{style_encoder_forward.2} parent=11 // pred_check
        %p341 = pneg %p87
      $region18: #{style_encoder_forward.2} parent=11 // pred_check_branch
        %343 = sbr.rel (%p341) target = $region20
      $region19: #{style_encoder_forward.2} parent=11 // pred_region
        _
      $region20: #{style_encoder_forward.2} parent=11 // pred_fallthru
        _
      // Predicated region
      $region21: #{style_encoder_forward.2} parent=11 // pred_check
        %p344 = pneg %p108
      $region22: #{style_encoder_forward.2} parent=11 // pred_check_branch
        %346 = sbr.rel (%p344) target = $region24
      $region23: #{style_encoder_forward.2} parent=11 // pred_region
        _
      $region24: #{style_encoder_forward.2} parent=11 // pred_fallthru
        _
      // Predicated region
      $region25: #{style_encoder_forward.2} parent=11 // pred_check
        %p347 = pneg %p129
      $region26: #{style_encoder_forward.2} parent=11 // pred_check_branch
        %349 = sbr.rel (%p347) target = $region28
      $region27: #{style_encoder_forward.2} parent=11 // pred_region
        _
      $region28: #{style_encoder_forward.2} parent=11 // pred_fallthru
        _
      // Predicated region
      $region29: #{style_encoder_forward.2} parent=11 // pred_check
        %p350 = pneg %p150
      $region30: #{style_encoder_forward.2} parent=11 // pred_check_branch
        %352 = sbr.rel (%p350) target = $region32
      $region31: #{style_encoder_forward.2} parent=11 // pred_region
        _
      $region32: #{style_encoder_forward.2} parent=11 // pred_fallthru
        _
      // Predicated region
      $region33: #{style_encoder_forward.2} parent=11 // pred_check
        %p353 = pneg %p171
      $region34: #{style_encoder_forward.2} parent=11 // pred_check_branch
        %355 = sbr.rel (%p353) target = $region36
      $region35: #{style_encoder_forward.2} parent=11 // pred_region
        _
      $region36: #{style_encoder_forward.2} parent=11 // pred_fallthru
        _
      // Predicated region
      $region37: #{style_encoder_forward.2} parent=11 // pred_check
        %p356 = pneg %p192
      $region38: #{style_encoder_forward.2} parent=11 // pred_check_branch
        %358 = sbr.rel (%p356) target = $region40
      $region39: #{style_encoder_forward.2} parent=11 // pred_region
        _
      $region40: #{style_encoder_forward.2} parent=11 // pred_fallthru
        _
      // Predicated region
      $region41: #{style_encoder_forward.2} parent=11 // pred_check
        %p359 = pneg %p213
      $region42: #{style_encoder_forward.2} parent=11 // pred_check_branch
        %361 = sbr.rel (%p359) target = $region44
      $region43: #{style_encoder_forward.2} parent=11 // pred_region
        _
      $region44: #{style_encoder_forward.2} parent=11 // pred_fallthru
        _
      // Predicated region
      $region45: #{style_encoder_forward.2} parent=11 // pred_check
        %p362 = pneg %p234
      $region46: #{style_encoder_forward.2} parent=11 // pred_check_branch
        %364 = sbr.rel (%p362) target = $region48
      $region47: #{style_encoder_forward.2} parent=11 // pred_region
        _
      $region48: #{style_encoder_forward.2} parent=11 // pred_fallthru
        _
      // Predicated region
      $region49: #{style_encoder_forward.2} parent=11 // pred_check
        %p365 = pneg %p255
      $region50: #{style_encoder_forward.2} parent=11 // pred_check_branch
        %367 = sbr.rel (%p365) target = $region52
      $region51: #{style_encoder_forward.2} parent=11 // pred_region
        _
      $region52: #{style_encoder_forward.2} parent=11 // pred_fallthru
        _
      // Predicated region
      $region53: #{style_encoder_forward.2} parent=11 // pred_check
        %p368 = pneg %p276
      $region54: #{style_encoder_forward.2} parent=11 // pred_check_branch
        %370 = sbr.rel (%p368) target = $region56
      $region55: #{style_encoder_forward.2} parent=11 // pred_region
        _
      $region56: #{style_encoder_forward.2} parent=11 // pred_fallthru
        _
      // Predicated region
      $region57: #{style_encoder_forward.2} parent=11 // pred_check
        %p371 = pneg %p297
      $region58: #{style_encoder_forward.2} parent=11 // pred_check_branch
        %373 = sbr.rel (%p371) target = $region60
      $region59: #{style_encoder_forward.2} parent=11 // pred_region
        _
      $region60: #{style_encoder_forward.2} parent=11 // pred_fallthru
        _
    $region12: #{style_encoder_forward.2} parent=5 // pred_fallthru
      _
    %p374 = scmp.lt.s32.totalorder %s19, 2
    // Predicated region
    $region61: #{style_encoder_forward.2} parent=5 // pred_check
      %p375 = pneg %p374
    $region62: #{style_encoder_forward.2} parent=5 // pred_check_branch
      %377 = sbr.rel (%p375) target = $region64
    $region63: #{style_encoder_forward.2} parent=5 // pred_region
      // Predicated region
      $region65: #{style_encoder_forward.2} parent=63 // pred_check
        %p378 = pneg %p39
      $region66: #{style_encoder_forward.2} parent=63 // pred_check_branch
        %380 = sbr.rel (%p378) target = $region68
      $region67: #{style_encoder_forward.2} parent=63 // pred_region
        %p381 = scmp.lt.s32.totalorder %s19, 1
        %s382 = scalar_select %p381, %s19, 1
        %s383 = smul.addr %s382, 8
        %s384 = scalar_lea.vmem %s0, %s383
      $region68: #{style_encoder_forward.2} parent=63 // pred_fallthru
        _
    $region64: #{style_encoder_forward.2} parent=5 // pred_fallthru
      _
    %p385 = scmp.le.s32.totalorder 1, %s19
    %p386 = scmp.lt.s32.totalorder %s19, 3
    %p387 = pnand %p385, %p386
    %p388 = pneg %p387
    // Predicated region
    $region69: #{style_encoder_forward.2} parent=5 // pred_check
      _
    $region70: #{style_encoder_forward.2} parent=5 // pred_check_branch
      %390 = sbr.rel (%p387) target = $region72
    $region71: #{style_encoder_forward.2} parent=5 // pred_region
      %s391 = ssub.s32 %s19, 1
      %p392 = scmp.lt.s32.totalorder %s24, 1
      %s393 = scalar_select %p392, %s24, 1
      %s394 = smul.addr %s393, 8
      %s395 = scalar_lea.vmem %s0, %s394
      %p396 = pneg %p45
      %p397 = pneg %p42
      %p398 = pneg %p66
      %p399 = pneg %p63
      %p400 = pneg %p87
      %p401 = pneg %p84
      %p402 = pneg %p108
      %p403 = pneg %p105
      %p404 = pneg %p129
      %p405 = pneg %p126
      %p406 = pneg %p150
      %p407 = pneg %p147
      %p408 = pneg %p171
      %p409 = pneg %p168
      %p410 = pneg %p192
      %p411 = pneg %p189
      %p412 = pneg %p213
      %p413 = pneg %p210
      %p414 = pneg %p234
      %p415 = pneg %p231
      %p416 = pneg %p255
      %p417 = pneg %p252
      %p418 = pneg %p276
      %p419 = pneg %p273
      %p420 = pneg %p297
      %p421 = pneg %p294
      %p422 = pneg %p323
      %p423 = pneg %p320
      %p424 = scmp.lt.s32.totalorder %s24, 1
      %s425 = scalar_select %p424, %s24, 1
      %s426 = smul.addr %s425, 8
      %s427 = scalar_lea.vmem %s13, %s426
      %p428 = scmp.lt.s32.totalorder %s24, 1
      %s429 = scalar_select %p428, %s24, 1
      %s430 = smul.addr %s429, 8
      %s431 = scalar_lea.vmem %s0, %s430
      %p432 = scmp.lt.s32.totalorder %s24, 1
      %s433 = scalar_select %p432, %s24, 1
      %s434 = smul.addr %s433, 8
      %s435 = scalar_lea.vmem %s13, %s434
      %v436 = vld [vmem:[%s431] sm:$0xff]
      %v437 = vld [vmem:[%s1] sm:$0xff]
      %v438 = vld [vmem:[%s1 + $0x8] sm:$0xff]
      %v439 = vld [vmem:[%s1 + $0x10] sm:$0xff]
      %v440 = vld [vmem:[%s1 + $0x18] sm:$0xff]
      %v441 = vld [vmem:[%s2] sm:$0x1]
      %v443 = vlaneseq
      %v444 = vshrl.u32 %v443, 7
      %v445 = vsub.s32 0, %v444
      %v446 = vrot.slane %v441, %v445
      %vm448 = vcmask 261120
      %v450 = vsel %vm448, %v436, 0
      %452 = vmatprep.subr.mxu0 0.0
      %453 = vmatpush1.msra.mxu0 %v437
      %454 = vmatprep.subr.mxu0 0.0
      %455 = vmatpush1.msra.mxu0 %v438
      %456 = vmatprep.subr.mxu0 0.0
      %457 = vmatpush1.msra.mxu0 %v439
      %458 = vmatprep.subr.mxu0 0.0
      %459 = vmatpush1.msra.mxu0 %v440
      %460 = vmatprep.subr.mxu0 0.0
      %461 = vmatpush1.msra.mxu0 0.0
      %462 = vmatprep.subr.mxu0 0.0
      %463 = vmatpush1.msra.mxu0 0.0
      %464 = vmatprep.subr.mxu0 0.0
      %465 = vmatpush1.msra.mxu0 0.0
      %466 = vmatprep.subr.mxu0 0.0
      %467 = vmatpush1.msra.mxu0 0.0
      %468 = vmatprep.subr.mxu0 0.0
      %469 = vmatpush1.msra.mxu0 0.0
      %470 = vmatprep.subr.mxu0 0.0
      %471 = vmatpush1.msra.mxu0 0.0
      %472 = vmatprep.subr.mxu0 0.0
      %473 = vmatpush1.msra.mxu0 0.0
      %474 = vmatprep.subr.mxu0 0.0
      %475 = vmatpush1.msra.mxu0 0.0
      %476 = vmatprep.subr.mxu0 0.0
      %477 = vmatpush1.msra.mxu0 0.0
      %478 = vmatprep.subr.mxu0 0.0
      %479 = vmatpush1.msra.mxu0 0.0
      %480 = vmatprep.subr.mxu0 0.0
      %481 = vmatpush1.msra.mxu0 0.0
      %482 = vmatprep.subr.mxu0 0.0
      %483 = vmatpush1.msra.mxu0 0.0
      %484 = vmatprep.subr.mxu0 0.0
      %485 = vmatpush1.msra.mxu0 0.0
      %486 = vmatprep.subr.mxu0 0.0
      %487 = vmatpush1.msra.mxu0 0.0
      %488 = vmatprep.subr.mxu0 0.0
      %489 = vmatpush1.msra.mxu0 0.0
      %490 = vmatprep.subr.mxu0 0.0
      %491 = vmatpush1.msra.mxu0 0.0
      %492 = vmatprep.subr.mxu0 0.0
      %493 = vmatpush1.msra.mxu0 0.0
      %494 = vmatprep.subr.mxu0 0.0
      %495 = vmatpush1.msra.mxu0 0.0
      %496 = vmatprep.subr.mxu0 0.0
      %497 = vmatpush1.msra.mxu0 0.0
      %498 = vmatprep.subr.mxu0 0.0
      %499 = vmatpush1.msra.mxu0 0.0
      %500 = vmatprep.subr.mxu0 0.0
      %501 = vmatpush1.msra.mxu0 0.0
      %502 = vmatprep.subr.mxu0 0.0
      %503 = vmatpush1.msra.mxu0 0.0
      %504 = vmatprep.subr.mxu0 0.0
      %505 = vmatpush1.msra.mxu0 0.0
      %506 = vmatprep.subr.mxu0 0.0
      %507 = vmatpush1.msra.mxu0 0.0
      %508 = vmatprep.subr.mxu0 0.0
      %509 = vmatpush1.msra.mxu0 0.0
      %510 = vmatprep.subr.mxu0 0.0
      %511 = vmatpush1.msra.mxu0 0.0
      %512 = vmatprep.subr.mxu0 0.0
      %513 = vmatpush1.msra.mxu0 0.0
      %514 = vmatprep.subr.mxu0 0.0
      %515 = vmatpush1.msra.mxu0 0.0
      %516 = vmatprep.mubr.f32.mxu0 0.0
      %517 = vmatmul.mubr.f32.gmra.mrb[0].mxu0 %v450
      %v518 = vpop.f32.mrb[0].mxu0
      %v519 = vadd.f32 %v446, %v518
      %v520 = vpop.f32.mrb[0].mxu0
      %521 = vdwg.mxu0
      %523 = vrot.lane.b32.xlu0 %v519, 96
      %v524 = vpop.permute.xlu0 %523
      %vm525 = vcmask 130048
      %v526 = vsel %vm525, %v519, 0
      %v528 = vsel %vm525, %v524, 0
      %530 = vmatprep.subr.mxu0 0.0
      %531 = vmatpush1.xpose.msra.mxu0 %v528
      %532 = vmatprep.subr.mxu0 0.0
      %533 = vmatpush1.xpose.msra.mxu0 0.0
      %534 = vmatprep.subr.mxu0 0.0
      %535 = vmatpush1.xpose.msra.mxu0 0.0
      %536 = vmatprep.subr.mxu0 0.0
      %537 = vmatpush1.xpose.msra.mxu0 0.0
      %538 = vmatprep.subr.mxu0 0.0
      %539 = vmatpush1.xpose.msra.mxu0 0.0
      %540 = vmatprep.subr.mxu0 0.0
      %541 = vmatpush1.xpose.msra.mxu0 0.0
      %542 = vmatprep.subr.mxu0 0.0
      %543 = vmatpush1.xpose.msra.mxu0 0.0
      %544 = vmatprep.subr.mxu0 0.0
      %545 = vmatpush1.xpose.msra.mxu0 0.0
      %546 = vmatprep.subr.mxu0 0.0
      %547 = vmatpush1.xpose.msra.mxu0 0.0
      %548 = vmatprep.subr.mxu0 0.0
      %549 = vmatpush1.xpose.msra.mxu0 0.0
      %550 = vmatprep.subr.mxu0 0.0
      %551 = vmatpush1.xpose.msra.mxu0 0.0
      %552 = vmatprep.subr.mxu0 0.0
      %553 = vmatpush1.xpose.msra.mxu0 0.0
      %554 = vmatprep.subr.mxu0 0.0
      %555 = vmatpush1.xpose.msra.mxu0 0.0
      %556 = vmatprep.subr.mxu0 0.0
      %557 = vmatpush1.xpose.msra.mxu0 0.0
      %558 = vmatprep.subr.mxu0 0.0
      %559 = vmatpush1.xpose.msra.mxu0 0.0
      %560 = vmatprep.subr.mxu0 0.0
      %561 = vmatpush1.xpose.msra.mxu0 0.0
      %562 = vmatprep.subr.mxu0 0.0
      %563 = vmatpush1.xpose.msra.mxu0 0.0
      %564 = vmatprep.subr.mxu0 0.0
      %565 = vmatpush1.xpose.msra.mxu0 0.0
      %566 = vmatprep.subr.mxu0 0.0
      %567 = vmatpush1.xpose.msra.mxu0 0.0
      %568 = vmatprep.subr.mxu0 0.0
      %569 = vmatpush1.xpose.msra.mxu0 0.0
      %570 = vmatprep.subr.mxu0 0.0
      %571 = vmatpush1.xpose.msra.mxu0 0.0
      %572 = vmatprep.subr.mxu0 0.0
      %573 = vmatpush1.xpose.msra.mxu0 0.0
      %574 = vmatprep.subr.mxu0 0.0
      %575 = vmatpush1.xpose.msra.mxu0 0.0
      %576 = vmatprep.subr.mxu0 0.0
      %577 = vmatpush1.xpose.msra.mxu0 0.0
      %578 = vmatprep.subr.mxu0 0.0
      %579 = vmatpush1.xpose.msra.mxu0 0.0
      %580 = vmatprep.subr.mxu0 0.0
      %581 = vmatpush1.xpose.msra.mxu0 0.0
      %582 = vmatprep.subr.mxu0 0.0
      %583 = vmatpush1.xpose.msra.mxu0 0.0
      %584 = vmatprep.subr.mxu0 0.0
      %585 = vmatpush1.xpose.msra.mxu0 0.0
      %586 = vmatprep.subr.mxu0 0.0
      %587 = vmatpush1.xpose.msra.mxu0 0.0
      %588 = vmatprep.subr.mxu0 0.0
      %589 = vmatpush1.xpose.msra.mxu0 0.0
      %590 = vmatprep.subr.mxu0 0.0
      %591 = vmatpush1.xpose.msra.mxu0 0.0
      %592 = vmatprep.subr.mxu0 0.0
      %593 = vmatpush1.xpose.msra.mxu0 0.0
      %594 = vmatprep.mubr.f32.mxu0 0.0
      %595 = vmatmul.mubr.f32.gmra.mrb[0].mxu0 %v526
      %v596 = vpop.f32.mrb[0].mxu0
      %v597 = vadd.f32 0.0, %v596
      %v598 = vpop.f32.mrb[0].mxu0
      %599 = vdwg.mxu0
      %vm600 = vcmask 64512
      %v601 = vsel %vm600, %v597, -inf
      %602 = vmax.xlane.f32.xlu0 %v601
      %v603 = vpop.xlane.xlu0 %602
      %v604 = vsub.f32 %v597, %v603
      %v605 = vmul.f32 %v604, 1.442695
      %v606 = vpow.pop %v605
      %v607 = vsel %vm600, %v606, 0.0
      %608 = vadd.xlane.f32.xlu0 %v607
      %v609 = vpop.xlane.xlu0 %608
      %v610 = vrcp.pop %v609
      %v611 = vmul.f32 %v606, %v610
      %612 = vrot.lane.b32.xlu0 %v519, 64
      %v613 = vpop.permute.xlu0 %612
      %v616 = vsel %vm600, %v611, 0
      %618 = vmatprep.subr.mxu0 0.0
      %619 = vmatpush1.msra.mxu0 %v613
      %620 = vmatprep.subr.mxu0 0.0
      %621 = vmatpush1.msra.mxu0 0.0
      %622 = vmatprep.subr.mxu0 0.0
      %623 = vmatpush1.msra.mxu0 0.0
      %624 = vmatprep.subr.mxu0 0.0
      %625 = vmatpush1.msra.mxu0 0.0
      %626 = vmatprep.subr.mxu0 0.0
      %627 = vmatpush1.msra.mxu0 0.0
      %628 = vmatprep.subr.mxu0 0.0
      %629 = vmatpush1.msra.mxu0 0.0
      %630 = vmatprep.subr.mxu0 0.0
      %631 = vmatpush1.msra.mxu0 0.0
      %632 = vmatprep.subr.mxu0 0.0
      %633 = vmatpush1.msra.mxu0 0.0
      %634 = vmatprep.subr.mxu0 0.0
      %635 = vmatpush1.msra.mxu0 0.0
      %636 = vmatprep.subr.mxu0 0.0
      %637 = vmatpush1.msra.mxu0 0.0
      %638 = vmatprep.subr.mxu0 0.0
      %639 = vmatpush1.msra.mxu0 0.0
      %640 = vmatprep.subr.mxu0 0.0
      %641 = vmatpush1.msra.mxu0 0.0
      %642 = vmatprep.subr.mxu0 0.0
      %643 = vmatpush1.msra.mxu0 0.0
      %644 = vmatprep.subr.mxu0 0.0
      %645 = vmatpush1.msra.mxu0 0.0
      %646 = vmatprep.subr.mxu0 0.0
      %647 = vmatpush1.msra.mxu0 0.0
      %648 = vmatprep.subr.mxu0 0.0
      %649 = vmatpush1.msra.mxu0 0.0
      %650 = vmatprep.subr.mxu0 0.0
      %651 = vmatpush1.msra.mxu0 0.0
      %652 = vmatprep.subr.mxu0 0.0
      %653 = vmatpush1.msra.mxu0 0.0
      %654 = vmatprep.subr.mxu0 0.0
      %655 = vmatpush1.msra.mxu0 0.0
      %656 = vmatprep.subr.mxu0 0.0
      %657 = vmatpush1.msra.mxu0 0.0
      %658 = vmatprep.subr.mxu0 0.0
      %659 = vmatpush1.msra.mxu0 0.0
      %660 = vmatprep.subr.mxu0 0.0
      %661 = vmatpush1.msra.mxu0 0.0
      %662 = vmatprep.subr.mxu0 0.0
      %663 = vmatpush1.msra.mxu0 0.0
      %664 = vmatprep.subr.mxu0 0.0
      %665 = vmatpush1.msra.mxu0 0.0
      %666 = vmatprep.subr.mxu0 0.0
      %667 = vmatpush1.msra.mxu0 0.0
      %668 = vmatprep.subr.mxu0 0.0
      %669 = vmatpush1.msra.mxu0 0.0
      %670 = vmatprep.subr.mxu0 0.0
      %671 = vmatpush1.msra.mxu0 0.0
      %672 = vmatprep.subr.mxu0 0.0
      %673 = vmatpush1.msra.mxu0 0.0
      %674 = vmatprep.subr.mxu0 0.0
      %675 = vmatpush1.msra.mxu0 0.0
      %676 = vmatprep.subr.mxu0 0.0
      %677 = vmatpush1.msra.mxu0 0.0
      %678 = vmatprep.subr.mxu0 0.0
      %679 = vmatpush1.msra.mxu0 0.0
      %680 = vmatprep.subr.mxu0 0.0
      %681 = vmatpush1.msra.mxu0 0.0
      %682 = vmatprep.mubr.f32.mxu0 0.0
      %683 = vmatmul.mubr.f32.gmra.mrb[0].mxu0 %v616
      %v684 = vpop.f32.mrb[0].mxu0
      %v685 = vadd.f32 0.0, %v684
      %v686 = vpop.f32.mrb[0].mxu0
      %687 = vdwg.mxu0
      %688 = vrot.lane.b32.xlu0 %v519, 112
      %v689 = vpop.permute.xlu0 %688
      %690 = vrot.lane.b32.xlu0 %v519, 80
      %v691 = vpop.permute.xlu0 %690
      %v692 = vsel %vm525, %v689, 0
      %v694 = vsel %vm525, %v691, 0
      %696 = vmatprep.subr.mxu0 0.0
      %697 = vmatpush1.xpose.msra.mxu0 %v694
      %698 = vmatprep.subr.mxu0 0.0
      %699 = vmatpush1.xpose.msra.mxu0 0.0
      %700 = vmatprep.subr.mxu0 0.0
      %701 = vmatpush1.xpose.msra.mxu0 0.0
      %702 = vmatprep.subr.mxu0 0.0
      %703 = vmatpush1.xpose.msra.mxu0 0.0
      %704 = vmatprep.subr.mxu0 0.0
      %705 = vmatpush1.xpose.msra.mxu0 0.0
      %706 = vmatprep.subr.mxu0 0.0
      %707 = vmatpush1.xpose.msra.mxu0 0.0
      %708 = vmatprep.subr.mxu0 0.0
      %709 = vmatpush1.xpose.msra.mxu0 0.0
      %710 = vmatprep.subr.mxu0 0.0
      %711 = vmatpush1.xpose.msra.mxu0 0.0
      %712 = vmatprep.subr.mxu0 0.0
      %713 = vmatpush1.xpose.msra.mxu0 0.0
      %714 = vmatprep.subr.mxu0 0.0
      %715 = vmatpush1.xpose.msra.mxu0 0.0
      %716 = vmatprep.subr.mxu0 0.0
      %717 = vmatpush1.xpose.msra.mxu0 0.0
      %718 = vmatprep.subr.mxu0 0.0
      %719 = vmatpush1.xpose.msra.mxu0 0.0
      %720 = vmatprep.subr.mxu0 0.0
      %721 = vmatpush1.xpose.msra.mxu0 0.0
      %722 = vmatprep.subr.mxu0 0.0
      %723 = vmatpush1.xpose.msra.mxu0 0.0
      %724 = vmatprep.subr.mxu0 0.0
      %725 = vmatpush1.xpose.msra.mxu0 0.0
      %726 = vmatprep.subr.mxu0 0.0
      %727 = vmatpush1.xpose.msra.mxu0 0.0
      %728 = vmatprep.subr.mxu0 0.0
      %729 = vmatpush1.xpose.msra.mxu0 0.0
      %730 = vmatprep.subr.mxu0 0.0
      %731 = vmatpush1.xpose.msra.mxu0 0.0
      %732 = vmatprep.subr.mxu0 0.0
      %733 = vmatpush1.xpose.msra.mxu0 0.0
      %734 = vmatprep.subr.mxu0 0.0
      %735 = vmatpush1.xpose.msra.mxu0 0.0
      %736 = vmatprep.subr.mxu0 0.0
      %737 = vmatpush1.xpose.msra.mxu0 0.0
      %738 = vmatprep.subr.mxu0 0.0
      %739 = vmatpush1.xpose.msra.mxu0 0.0
      %740 = vmatprep.subr.mxu0 0.0
      %741 = vmatpush1.xpose.msra.mxu0 0.0
      %742 = vmatprep.subr.mxu0 0.0
      %743 = vmatpush1.xpose.msra.mxu0 0.0
      %744 = vmatprep.subr.mxu0 0.0
      %745 = vmatpush1.xpose.msra.mxu0 0.0
      %746 = vmatprep.subr.mxu0 0.0
      %747 = vmatpush1.xpose.msra.mxu0 0.0
      %748 = vmatprep.subr.mxu0 0.0
      %749 = vmatpush1.xpose.msra.mxu0 0.0
      %750 = vmatprep.subr.mxu0 0.0
      %751 = vmatpush1.xpose.msra.mxu0 0.0
      %752 = vmatprep.subr.mxu0 0.0
      %753 = vmatpush1.xpose.msra.mxu0 0.0
      %754 = vmatprep.subr.mxu0 0.0
      %755 = vmatpush1.xpose.msra.mxu0 0.0
      %756 = vmatprep.subr.mxu0 0.0
      %757 = vmatpush1.xpose.msra.mxu0 0.0
      %758 = vmatprep.subr.mxu0 0.0
      %759 = vmatpush1.xpose.msra.mxu0 0.0
      %760 = vmatprep.mubr.f32.mxu0 0.0
      %761 = vmatmul.mubr.f32.gmra.mrb[0].mxu0 %v692
      %v762 = vpop.f32.mrb[0].mxu0
      %v763 = vadd.f32 0.0, %v762
      %v764 = vpop.f32.mrb[0].mxu0
      %765 = vdwg.mxu0
      %v766 = vsel %vm600, %v763, -inf
      %767 = vmax.xlane.f32.xlu0 %v766
      %v768 = vpop.xlane.xlu0 %767
      %v769 = vsub.f32 %v763, %v768
      %v770 = vmul.f32 %v769, 1.442695
      %v771 = vpow.pop %v770
      %v772 = vsel %vm600, %v771, 0.0
      %773 = vadd.xlane.f32.xlu0 %v772
      %v774 = vpop.xlane.xlu0 %773
      %v775 = vrcp.pop %v774
      %v776 = vmul.f32 %v771, %v775
      %777 = vrot.lane.b32.xlu0 %v519, 48
      %v778 = vpop.permute.xlu0 %777
      %v781 = vsel %vm600, %v776, 0
      %783 = vmatprep.subr.mxu0 0.0
      %784 = vmatpush1.msra.mxu0 %v778
      %785 = vmatprep.subr.mxu0 0.0
      %786 = vmatpush1.msra.mxu0 0.0
      %787 = vmatprep.subr.mxu0 0.0
      %788 = vmatpush1.msra.mxu0 0.0
      %789 = vmatprep.subr.mxu0 0.0
      %790 = vmatpush1.msra.mxu0 0.0
      %791 = vmatprep.subr.mxu0 0.0
      %792 = vmatpush1.msra.mxu0 0.0
      %793 = vmatprep.subr.mxu0 0.0
      %794 = vmatpush1.msra.mxu0 0.0
      %795 = vmatprep.subr.mxu0 0.0
      %796 = vmatpush1.msra.mxu0 0.0
      %797 = vmatprep.subr.mxu0 0.0
      %798 = vmatpush1.msra.mxu0 0.0
      %799 = vmatprep.subr.mxu0 0.0
      %800 = vmatpush1.msra.mxu0 0.0
      %801 = vmatprep.subr.mxu0 0.0
      %802 = vmatpush1.msra.mxu0 0.0
      %803 = vmatprep.subr.mxu0 0.0
      %804 = vmatpush1.msra.mxu0 0.0
      %805 = vmatprep.subr.mxu0 0.0
      %806 = vmatpush1.msra.mxu0 0.0
      %807 = vmatprep.subr.mxu0 0.0
      %808 = vmatpush1.msra.mxu0 0.0
      %809 = vmatprep.subr.mxu0 0.0
      %810 = vmatpush1.msra.mxu0 0.0
      %811 = vmatprep.subr.mxu0 0.0
      %812 = vmatpush1.msra.mxu0 0.0
      %813 = vmatprep.subr.mxu0 0.0
      %814 = vmatpush1.msra.mxu0 0.0
      %815 = vmatprep.subr.mxu0 0.0
      %816 = vmatpush1.msra.mxu0 0.0
      %817 = vmatprep.subr.mxu0 0.0
      %818 = vmatpush1.msra.mxu0 0.0
      %819 = vmatprep.subr.mxu0 0.0
      %820 = vmatpush1.msra.mxu0 0.0
      %821 = vmatprep.subr.mxu0 0.0
      %822 = vmatpush1.msra.mxu0 0.0
      %823 = vmatprep.subr.mxu0 0.0
      %824 = vmatpush1.msra.mxu0 0.0
      %825 = vmatprep.subr.mxu0 0.0
      %826 = vmatpush1.msra.mxu0 0.0
      %827 = vmatprep.subr.mxu0 0.0
      %828 = vmatpush1.msra.mxu0 0.0
      %829 = vmatprep.subr.mxu0 0.0
      %830 = vmatpush1.msra.mxu0 0.0
      %831 = vmatprep.subr.mxu0 0.0
      %832 = vmatpush1.msra.mxu0 0.0
      %833 = vmatprep.subr.mxu0 0.0
      %834 = vmatpush1.msra.mxu0 0.0
      %835 = vmatprep.subr.mxu0 0.0
      %836 = vmatpush1.msra.mxu0 0.0
      %837 = vmatprep.subr.mxu0 0.0
      %838 = vmatpush1.msra.mxu0 0.0
      %839 = vmatprep.subr.mxu0 0.0
      %840 = vmatpush1.msra.mxu0 0.0
      %841 = vmatprep.subr.mxu0 0.0
      %842 = vmatpush1.msra.mxu0 0.0
      %843 = vmatprep.subr.mxu0 0.0
      %844 = vmatpush1.msra.mxu0 0.0
      %845 = vmatprep.subr.mxu0 0.0
      %846 = vmatpush1.msra.mxu0 0.0
      %847 = vmatprep.mubr.f32.mxu0 0.0
      %848 = vmatmul.mubr.f32.gmra.mrb[0].mxu0 %v781
      %v849 = vpop.f32.mrb[0].mxu0
      %v850 = vadd.f32 0.0, %v849
      %v851 = vpop.f32.mrb[0].mxu0
      %852 = vdwg.mxu0
      %854 = vrot.lane.b32.xlu0 %v850, 16
      %v855 = vpop.permute.xlu0 %854
      %v857 = vsel %vm525, %v685, %v855
      %v858 = vld [vmem:[%s3] sm:$0xff]
      %v859 = vld [vmem:[%s3 + $0x8] sm:$0xff]
      %v860 = vld [vmem:[%s3 + $0x10] sm:$0xff]
      %v861 = vld [vmem:[%s3 + $0x18] sm:$0xff]
      %v862 = vld [vmem:[%s4] sm:$0x1]
      %v864 = vlaneseq
      %v865 = vshrl.u32 %v864, 7
      %v866 = vsub.s32 0, %v865
      %v867 = vrot.slane %v862, %v866
      %v870 = vsel %vm448, %v857, 0
      %872 = vmatprep.subr.mxu0 0.0
      %873 = vmatpush1.msra.mxu0 %v858
      %874 = vmatprep.subr.mxu0 0.0
      %875 = vmatpush1.msra.mxu0 %v859
      %876 = vmatprep.subr.mxu0 0.0
      %877 = vmatpush1.msra.mxu0 %v860
      %878 = vmatprep.subr.mxu0 0.0
      %879 = vmatpush1.msra.mxu0 %v861
      %880 = vmatprep.subr.mxu0 0.0
      %881 = vmatpush1.msra.mxu0 0.0
      %882 = vmatprep.subr.mxu0 0.0
      %883 = vmatpush1.msra.mxu0 0.0
      %884 = vmatprep.subr.mxu0 0.0
      %885 = vmatpush1.msra.mxu0 0.0
      %886 = vmatprep.subr.mxu0 0.0
      %887 = vmatpush1.msra.mxu0 0.0
      %888 = vmatprep.subr.mxu0 0.0
      %889 = vmatpush1.msra.mxu0 0.0
      %890 = vmatprep.subr.mxu0 0.0
      %891 = vmatpush1.msra.mxu0 0.0
      %892 = vmatprep.subr.mxu0 0.0
      %893 = vmatpush1.msra.mxu0 0.0
      %894 = vmatprep.subr.mxu0 0.0
      %895 = vmatpush1.msra.mxu0 0.0
      %896 = vmatprep.subr.mxu0 0.0
      %897 = vmatpush1.msra.mxu0 0.0
      %898 = vmatprep.subr.mxu0 0.0
      %899 = vmatpush1.msra.mxu0 0.0
      %900 = vmatprep.subr.mxu0 0.0
      %901 = vmatpush1.msra.mxu0 0.0
      %902 = vmatprep.subr.mxu0 0.0
      %903 = vmatpush1.msra.mxu0 0.0
      %904 = vmatprep.subr.mxu0 0.0
      %905 = vmatpush1.msra.mxu0 0.0
      %906 = vmatprep.subr.mxu0 0.0
      %907 = vmatpush1.msra.mxu0 0.0
      %908 = vmatprep.subr.mxu0 0.0
      %909 = vmatpush1.msra.mxu0 0.0
      %910 = vmatprep.subr.mxu0 0.0
      %911 = vmatpush1.msra.mxu0 0.0
      %912 = vmatprep.subr.mxu0 0.0
      %913 = vmatpush1.msra.mxu0 0.0
      %914 = vmatprep.subr.mxu0 0.0
      %915 = vmatpush1.msra.mxu0 0.0
      %916 = vmatprep.subr.mxu0 0.0
      %917 = vmatpush1.msra.mxu0 0.0
      %918 = vmatprep.subr.mxu0 0.0
      %919 = vmatpush1.msra.mxu0 0.0
      %920 = vmatprep.subr.mxu0 0.0
      %921 = vmatpush1.msra.mxu0 0.0
      %922 = vmatprep.subr.mxu0 0.0
      %923 = vmatpush1.msra.mxu0 0.0
      %924 = vmatprep.subr.mxu0 0.0
      %925 = vmatpush1.msra.mxu0 0.0
      %926 = vmatprep.subr.mxu0 0.0
      %927 = vmatpush1.msra.mxu0 0.0
      %928 = vmatprep.subr.mxu0 0.0
      %929 = vmatpush1.msra.mxu0 0.0
      %930 = vmatprep.subr.mxu0 0.0
      %931 = vmatpush1.msra.mxu0 0.0
      %932 = vmatprep.subr.mxu0 0.0
      %933 = vmatpush1.msra.mxu0 0.0
      %934 = vmatprep.subr.mxu0 0.0
      %935 = vmatpush1.msra.mxu0 0.0
      %936 = vmatprep.mubr.f32.mxu0 0.0
      %937 = vmatmul.mubr.f32.gmra.mrb[0].mxu0 %v870
      %v938 = vpop.f32.mrb[0].mxu0
      %v939 = vadd.f32 %v867, %v938
      %v940 = vpop.f32.mrb[0].mxu0
      %941 = vdwg.mxu0
      %v942 = vadd.f32 %v939, %v436
      %v943 = vld [vmem:[%s5] sm:$0x1]
      %v944 = vld [vmem:[%s6] sm:$0x1]
      %v945 = vsel %vm448, %v942, 0.0
      %946 = vadd.xlane.f32.xlu0 %v945
      %v947 = vpop.xlane.xlu0 %946
      %v948 = vrcp.pop 32.0
      %v949 = vmul.f32 %v947, %v948
      %v950 = vsub.f32 %v942, %v949
      %v951 = vmul.f32 %v950, %v950
      %v952 = vsel %vm448, %v951, 0.0
      %953 = vadd.xlane.f32.xlu0 %v952
      %v954 = vpop.xlane.xlu0 %953
      %v955 = vmul.f32 %v954, %v948
      %v956 = vadd.f32 %v955, 1e-12
      %v957 = vrsqrt.pop %v956
      %v958 = vmul.f32 %v950, %v957
      %v960 = vlaneseq
      %v961 = vshrl.u32 %v960, 7
      %v962 = vsub.s32 0, %v961
      %v963 = vrot.slane %v943, %v962
      %v965 = vmul.f32 %v958, %v963
      %v967 = vlaneseq
      %v968 = vshrl.u32 %v967, 7
      %v969 = vsub.s32 0, %v968
      %v970 = vrot.slane %v944, %v969
      %v972 = vadd.f32 %v965, %v970
      %v973 = vld [vmem:[%s7] sm:$0xff]
      %v974 = vld [vmem:[%s7 + $0x8] sm:$0xff]
      %v975 = vld [vmem:[%s7 + $0x10] sm:$0xff]
      %v976 = vld [vmem:[%s7 + $0x18] sm:$0xff]
      %v977 = vld [vmem:[%s8] sm:$0x1]
      %v979 = vlaneseq
      %v980 = vshrl.u32 %v979, 7
      %v981 = vsub.s32 0, %v980
      %v982 = vrot.slane %v977, %v981
      %v985 = vsel %vm448, %v972, 0
      %987 = vmatprep.subr.mxu0 0.0
      %988 = vmatpush1.msra.mxu0 %v973
      %989 = vmatprep.subr.mxu0 0.0
      %990 = vmatpush1.msra.mxu0 %v974
      %991 = vmatprep.subr.mxu0 0.0
      %992 = vmatpush1.msra.mxu0 %v975
      %993 = vmatprep.subr.mxu0 0.0
      %994 = vmatpush1.msra.mxu0 %v976
      %995 = vmatprep.subr.mxu0 0.0
      %996 = vmatpush1.msra.mxu0 0.0
      %997 = vmatprep.subr.mxu0 0.0
      %998 = vmatpush1.msra.mxu0 0.0
      %999 = vmatprep.subr.mxu0 0.0
      %1000 = vmatpush1.msra.mxu0 0.0
      %1001 = vmatprep.subr.mxu0 0.0
      %1002 = vmatpush1.msra.mxu0 0.0
      %1003 = vmatprep.subr.mxu0 0.0
      %1004 = vmatpush1.msra.mxu0 0.0
      %1005 = vmatprep.subr.mxu0 0.0
      %1006 = vmatpush1.msra.mxu0 0.0
      %1007 = vmatprep.subr.mxu0 0.0
      %1008 = vmatpush1.msra.mxu0 0.0
      %1009 = vmatprep.subr.mxu0 0.0
      %1010 = vmatpush1.msra.mxu0 0.0
      %1011 = vmatprep.subr.mxu0 0.0
      %1012 = vmatpush1.msra.mxu0 0.0
      %1013 = vmatprep.subr.mxu0 0.0
      %1014 = vmatpush1.msra.mxu0 0.0
      %1015 = vmatprep.subr.mxu0 0.0
      %1016 = vmatpush1.msra.mxu0 0.0
      %1017 = vmatprep.subr.mxu0 0.0
      %1018 = vmatpush1.msra.mxu0 0.0
      %1019 = vmatprep.subr.mxu0 0.0
      %1020 = vmatpush1.msra.mxu0 0.0
      %1021 = vmatprep.subr.mxu0 0.0
      %1022 = vmatpush1.msra.mxu0 0.0
      %1023 = vmatprep.subr.mxu0 0.0
      %1024 = vmatpush1.msra.mxu0 0.0
      %1025 = vmatprep.subr.mxu0 0.0
      %1026 = vmatpush1.msra.mxu0 0.0
      %1027 = vmatprep.subr.mxu0 0.0
      %1028 = vmatpush1.msra.mxu0 0.0
      %1029 = vmatprep.subr.mxu0 0.0
      %1030 = vmatpush1.msra.mxu0 0.0
      %1031 = vmatprep.subr.mxu0 0.0
      %1032 = vmatpush1.msra.mxu0 0.0
      %1033 = vmatprep.subr.mxu0 0.0
      %1034 = vmatpush1.msra.mxu0 0.0
      %1035 = vmatprep.subr.mxu0 0.0
      %1036 = vmatpush1.msra.mxu0 0.0
      %1037 = vmatprep.subr.mxu0 0.0
      %1038 = vmatpush1.msra.mxu0 0.0
      %1039 = vmatprep.subr.mxu0 0.0
      %1040 = vmatpush1.msra.mxu0 0.0
      %1041 = vmatprep.subr.mxu0 0.0
      %1042 = vmatpush1.msra.mxu0 0.0
      %1043 = vmatprep.subr.mxu0 0.0
      %1044 = vmatpush1.msra.mxu0 0.0
      %1045 = vmatprep.subr.mxu0 0.0
      %1046 = vmatpush1.msra.mxu0 0.0
      %1047 = vmatprep.subr.mxu0 0.0
      %1048 = vmatpush1.msra.mxu0 0.0
      %1049 = vmatprep.subr.mxu0 0.0
      %1050 = vmatpush1.msra.mxu0 0.0
      %1051 = vmatprep.mubr.f32.mxu0 0.0
      %1052 = vmatmul.mubr.f32.gmra.mrb[0].mxu0 %v985
      %v1053 = vpop.f32.mrb[0].mxu0
      %v1054 = vadd.f32 %v982, %v1053
      %v1055 = vpop.f32.mrb[0].mxu0
      %1056 = vdwg.mxu0
      %v1057 = vmul.f32 %v1054, 0.5
      %v1058 = vmul.f32 %v1054, 0.044715
      %v1059 = vmul.f32 %v1058, %v1054
      %v1060 = vmul.f32 %v1059, %v1054
      %v1061 = vadd.f32 %v1054, %v1060
      %v1062 = vmul.f32 %v1061, 0.7978846
      %v1063 = vtanh.pop %v1062
      %v1064 = vadd.f32 %v1063, 1.0
      %v1065 = vmul.f32 %v1057, %v1064
      %v1066 = vld [vmem:[%s9] sm:$0xff]
      %v1067 = vld [vmem:[%s9 + $0x8] sm:$0xff]
      %v1068 = vld [vmem:[%s9 + $0x10] sm:$0xff]
      %v1069 = vld [vmem:[%s9 + $0x18] sm:$0xff]
      %v1070 = vld [vmem:[%s9 + $0x20] sm:$0xff]
      %v1071 = vld [vmem:[%s9 + $0x28] sm:$0xff]
      %v1072 = vld [vmem:[%s9 + $0x30] sm:$0xff]
      %v1073 = vld [vmem:[%s9 + $0x38] sm:$0xff]
      %v1074 = vld [vmem:[%s9 + $0x40] sm:$0xff]
      %v1075 = vld [vmem:[%s9 + $0x48] sm:$0xff]
      %v1076 = vld [vmem:[%s9 + $0x50] sm:$0xff]
      %v1077 = vld [vmem:[%s9 + $0x58] sm:$0xff]
      %v1078 = vld [vmem:[%s9 + $0x60] sm:$0xff]
      %v1079 = vld [vmem:[%s9 + $0x68] sm:$0xff]
      %v1080 = vld [vmem:[%s9 + $0x70] sm:$0xff]
      %v1081 = vld [vmem:[%s9 + $0x78] sm:$0xff]
      %v1082 = vld [vmem:[%s10] sm:$0x1]
      %v1084 = vlaneseq
      %v1085 = vshrl.u32 %v1084, 7
      %v1086 = vsub.s32 0, %v1085
      %v1087 = vrot.slane %v1082, %v1086
      %1089 = vmatprep.subr.mxu0 0.0
      %1090 = vmatpush1.msra.mxu0 %v1066
      %1091 = vmatprep.subr.mxu0 0.0
      %1092 = vmatpush1.msra.mxu0 %v1067
      %1093 = vmatprep.subr.mxu0 0.0
      %1094 = vmatpush1.msra.mxu0 %v1068
      %1095 = vmatprep.subr.mxu0 0.0
      %1096 = vmatpush1.msra.mxu0 %v1069
      %1097 = vmatprep.subr.mxu0 0.0
      %1098 = vmatpush1.msra.mxu0 %v1070
      %1099 = vmatprep.subr.mxu0 0.0
      %1100 = vmatpush1.msra.mxu0 %v1071
      %1101 = vmatprep.subr.mxu0 0.0
      %1102 = vmatpush1.msra.mxu0 %v1072
      %1103 = vmatprep.subr.mxu0 0.0
      %1104 = vmatpush1.msra.mxu0 %v1073
      %1105 = vmatprep.subr.mxu0 0.0
      %1106 = vmatpush1.msra.mxu0 %v1074
      %1107 = vmatprep.subr.mxu0 0.0
      %1108 = vmatpush1.msra.mxu0 %v1075
      %1109 = vmatprep.subr.mxu0 0.0
      %1110 = vmatpush1.msra.mxu0 %v1076
      %1111 = vmatprep.subr.mxu0 0.0
      %1112 = vmatpush1.msra.mxu0 %v1077
      %1113 = vmatprep.subr.mxu0 0.0
      %1114 = vmatpush1.msra.mxu0 %v1078
      %1115 = vmatprep.subr.mxu0 0.0
      %1116 = vmatpush1.msra.mxu0 %v1079
      %1117 = vmatprep.subr.mxu0 0.0
      %1118 = vmatpush1.msra.mxu0 %v1080
      %1119 = vmatprep.subr.mxu0 0.0
      %1120 = vmatpush1.msra.mxu0 %v1081
      %1121 = vmatprep.subr.mxu0 0.0
      %1122 = vmatpush1.msra.mxu0 0.0
      %1123 = vmatprep.subr.mxu0 0.0
      %1124 = vmatpush1.msra.mxu0 0.0
      %1125 = vmatprep.subr.mxu0 0.0
      %1126 = vmatpush1.msra.mxu0 0.0
      %1127 = vmatprep.subr.mxu0 0.0
      %1128 = vmatpush1.msra.mxu0 0.0
      %1129 = vmatprep.subr.mxu0 0.0
      %1130 = vmatpush1.msra.mxu0 0.0
      %1131 = vmatprep.subr.mxu0 0.0
      %1132 = vmatpush1.msra.mxu0 0.0
      %1133 = vmatprep.subr.mxu0 0.0
      %1134 = vmatpush1.msra.mxu0 0.0
      %1135 = vmatprep.subr.mxu0 0.0
      %1136 = vmatpush1.msra.mxu0 0.0
      %1137 = vmatprep.subr.mxu0 0.0
      %1138 = vmatpush1.msra.mxu0 0.0
      %1139 = vmatprep.subr.mxu0 0.0
      %1140 = vmatpush1.msra.mxu0 0.0
      %1141 = vmatprep.subr.mxu0 0.0
      %1142 = vmatpush1.msra.mxu0 0.0
      %1143 = vmatprep.subr.mxu0 0.0
      %1144 = vmatpush1.msra.mxu0 0.0
      %1145 = vmatprep.subr.mxu0 0.0
      %1146 = vmatpush1.msra.mxu0 0.0
      %1147 = vmatprep.subr.mxu0 0.0
      %1148 = vmatpush1.msra.mxu0 0.0
      %1149 = vmatprep.subr.mxu0 0.0
      %1150 = vmatpush1.msra.mxu0 0.0
      %1151 = vmatprep.subr.mxu0 0.0
      %1152 = vmatpush1.msra.mxu0 0.0
      %1153 = vmatprep.mubr.f32.mxu0 0.0
      %1154 = vmatmul.mubr.f32.gmra.mrb[0].mxu0 %v1065
      %v1155 = vpop.f32.mrb[0].mxu0
      %v1156 = vadd.f32 %v1087, %v1155
      %v1157 = vpop.f32.mrb[0].mxu0
      %1158 = vdwg.mxu0
      %v1159 = vadd.f32 %v1156, %v972
      %v1160 = vld [vmem:[%s11] sm:$0x1]
      %v1161 = vld [vmem:[%s12] sm:$0x1]
      %v1162 = vsel %vm448, %v1159, 0.0
      %1163 = vadd.xlane.f32.xlu0 %v1162
      %v1164 = vpop.xlane.xlu0 %1163
      %v1165 = vmul.f32 %v1164, %v948
      %v1166 = vsub.f32 %v1159, %v1165
      %v1167 = vmul.f32 %v1166, %v1166
      %v1168 = vsel %vm448, %v1167, 0.0
      %1169 = vadd.xlane.f32.xlu0 %v1168
      %v1170 = vpop.xlane.xlu0 %1169
      %v1171 = vmul.f32 %v1170, %v948
      %v1172 = vadd.f32 %v1171, 1e-12
      %v1173 = vrsqrt.pop %v1172
      %v1174 = vmul.f32 %v1166, %v1173
      %v1176 = vlaneseq
      %v1177 = vshrl.u32 %v1176, 7
      %v1178 = vsub.s32 0, %v1177
      %v1179 = vrot.slane %v1160, %v1178
      %v1181 = vmul.f32 %v1174, %v1179
      %v1183 = vlaneseq
      %v1184 = vshrl.u32 %v1183, 7
      %v1185 = vsub.s32 0, %v1184
      %v1186 = vrot.slane %v1161, %v1185
      %v1188 = vadd.f32 %v1181, %v1186
      %1189 = vst.msk [vmem:[%s435] sm:$0xff] %vm448, %v1188
      %p1190 = scmp.lt.s32.totalorder %s24, 1
      %s1191 = scalar_select %p1190, %s24, 1
      %s1192 = smul.addr %s1191, 8
      %s1193 = scalar_lea.vmem %s13, %s1192
      // Predicated region
      $region73: #{style_encoder_forward.2} parent=71 // pred_check
        %p1194 = pneg %p320
      $region74: #{style_encoder_forward.2} parent=71 // pred_check_branch
        %1196 = sbr.rel (%p1194) target = $region76
      $region75: #{style_encoder_forward.2} parent=71 // pred_region
        _
      $region76: #{style_encoder_forward.2} parent=71 // pred_fallthru
        _
    $region72: #{style_encoder_forward.2} parent=5 // pred_fallthru
      _
    %p1197 = scmp.le.s32.totalorder 2, %s19
    // Predicated region
    $region77: #{style_encoder_forward.2} parent=5 // pred_check
      %p1198 = pneg %p1197
    $region78: #{style_encoder_forward.2} parent=5 // pred_check_branch
      %1200 = sbr.rel (%p1198) target = $region80
    $region79: #{style_encoder_forward.2} parent=5 // pred_region
      %s1201 = ssub.s32 %s19, 2
      // Predicated region
      $region81: #{style_encoder_forward.2} parent=79 // pred_check
        %p1202 = pneg %p326
      $region82: #{style_encoder_forward.2} parent=79 // pred_check_branch
        %1204 = sbr.rel (%p1202) target = $region84
      $region83: #{style_encoder_forward.2} parent=79 // pred_region
        %p1205 = scmp.lt.s32.totalorder %s25, 1
        %s1206 = scalar_select %p1205, %s25, 1
        %s1207 = smul.addr %s1206, 8
        %s1208 = scalar_lea.vmem %s13, %s1207
      $region84: #{style_encoder_forward.2} parent=79 // pred_fallthru
        _
    $region80: #{style_encoder_forward.2} parent=5 // pred_fallthru
      _
  $region6: #{style_encoder_forward.2} parent=0 // loop_footer
    %s23 = sadd.s32 1, %s19
  $region7: #{style_encoder_forward.2} parent=0 // loop_footer_branch
    %18 = sbr.rel target = $region3
  $region8: #{style_encoder_forward.2} parent=0 // loop_exit
    _

</llo_original>
